<compile_context>
chip_gen: v7x
topology: tpu7x:2x2x1
jax: 0.10.0
libtpu: 0.0.40
codegen_flags: <defaults>
</compile_context>

<pallas_src>
import functools
import math

import jax
import jax.numpy as jnp
import numpy as np
from jax.experimental import pallas as pl
from jax.experimental.pallas import tpu as pltpu

_MASK_NEG = -1e30  # finite "−inf": avoids NaN (inf − inf) on fully-masked query rows


def _layer_norm(x, gamma, beta, eps=1e-5):
    mean = jnp.mean(x, axis=-1, keepdims=True)
    var = jnp.mean((x - mean) ** 2, axis=-1, keepdims=True)
    return (x - mean) * jax.lax.rsqrt(var + eps) * gamma + beta


def _pick_batch_tile(batch, seq, target_rows=256):
    """Largest divisor of `batch` whose row-slab (Bt*S) stays near target_rows."""
    bt = 1
    for cand in range(1, batch + 1):
        if batch % cand == 0 and cand * seq <= max(target_rows, seq):
            bt = cand
    return bt


def encoder_layer_kernel(
    x_ref, bias_ref, npad_ref,
    wq_ref, bq_ref, wk_ref, bk_ref, wv_ref, bv_ref,
    wo_ref, bo_ref, ln1_g_ref, ln1_b_ref,
    w1_ref, b1_ref, w2_ref, b2_ref, ln2_g_ref, ln2_b_ref,
    out_ref, attn_ref,
    cat_ref,                       # VMEM scratch: (Bt, S, H*dv) f32 head-output concat
    *, num_heads, dim_key, dim_value):
    """Processes Bt batch elements (Bt*S rows) per grid step."""
    H, dk, dv = num_heads, dim_key, dim_value

    x = x_ref[...]                               # (R, D) f32, R = Bt * S
    R, D = x.shape
    Bt, S, _ = bias_ref.shape
    npad = npad_ref[...]                         # (R, 1) f32 non-pad mask (rows)

    xb = x.astype(jnp.bfloat16)

    # ---- Fused Q/K/V projections over all heads (one wide matmul each) ----
    q_all = jnp.dot(xb, wq_ref[...], preferred_element_type=jnp.float32) + bq_ref[...]
    k_all = jnp.dot(xb, wk_ref[...], preferred_element_type=jnp.float32) + bk_ref[...]
    v_all = jnp.dot(xb, wv_ref[...], preferred_element_type=jnp.float32) + bv_ref[...]

    q3 = q_all.reshape(Bt, S, H * dk)            # split rows back into (batch, seq)
    k3 = k_all.reshape(Bt, S, H * dk)
    v3 = v_all.reshape(Bt, S, H * dv)

    bias = bias_ref[...].astype(jnp.float32)     # (Bt, S, S) additive mask bias
    inv_temp = 1.0 / float(math.sqrt(dk))

    # ---- Per-head attention (static small loop; batched over Bt inside) ----
    for h in range(H):
        q = q3[:, :, h * dk:(h + 1) * dk].astype(jnp.bfloat16)   # (Bt, S, dk)
        k = k3[:, :, h * dk:(h + 1) * dk].astype(jnp.bfloat16)
        v = v3[:, :, h * dv:(h + 1) * dv].astype(jnp.bfloat16)

        s = jnp.einsum("bqd,bkd->bqk", q, k,
                       preferred_element_type=jnp.float32) * inv_temp + bias
        m = jnp.max(s, axis=-1, keepdims=True)
        e = jnp.exp(s - m)
        denom = jnp.sum(e, axis=-1, keepdims=True)               # >= 1 (well-conditioned)
        attn = e * pl.reciprocal(denom, approx=True)             # EUP reciprocal
        attn_ref[h] = attn                                       # (Bt, S, S)

        ho = jnp.einsum("bqk,bkd->bqd", attn.astype(jnp.bfloat16), v,
                        preferred_element_type=jnp.float32)      # (Bt, S, dv)
        cat_ref[:, :, h * dv:(h + 1) * dv] = ho                  # build concat in VMEM

    # ---- Output projection: one matmul on the concatenated heads ----
    cat = cat_ref[...].reshape(R, H * dv).astype(jnp.bfloat16)
    proj = jnp.dot(cat, wo_ref[...], preferred_element_type=jnp.float32) + bo_ref[...]

    out1 = _layer_norm(proj + x, ln1_g_ref[...], ln1_b_ref[...]) * npad

    # ---- Position-wise FFN: Conv1d(k=1) == pointwise linears ----
    h1 = jnp.maximum(
        jnp.dot(out1.astype(jnp.bfloat16), w1_ref[...],
                preferred_element_type=jnp.float32) + b1_ref[...], 0.0)
    h2 = jnp.dot(h1.astype(jnp.bfloat16), w2_ref[...],
                 preferred_element_type=jnp.float32) + b2_ref[...]
    out2 = _layer_norm(h2 + out1, ln2_g_ref[...], ln2_b_ref[...]) * npad

    out_ref[...] = out2
    # TODO(synk): dropout layers are no-ops here (inference/eval semantics).


def encoder_layer_forward(x, non_pad_mask, self_attn_mask, params, batch_tile=None):
    B, S, D = x.shape
    H = params["num_heads"]
    dk = params["dim_key"]
    dv = params["dim_value"]
    di = params["dim_inner"]

    Bt = batch_tile or _pick_batch_tile(B, S)
    assert B % Bt == 0
    R = Bt * S

    # Fold batch & sequence into the row (sublane) dimension for all row-wise tensors.
    x2 = x.reshape(B * S, D)
    npad2 = non_pad_mask.reshape(B * S, 1).astype(jnp.float32)
    # Additive attention bias in bf16 (half the DMA bytes of an f32 dense mask).
    attn_bias = jnp.where(self_attn_mask > 0,
                          jnp.float32(_MASK_NEG), jnp.float32(0.0)).astype(jnp.bfloat16)

    kernel = functools.partial(encoder_layer_kernel,
                               num_heads=H, dim_key=dk, dim_value=dv)

    def full(shape):
        return pl.BlockSpec(shape, lambda b, _s=shape: (0,) * len(_s))

    in_specs = [
        pl.BlockSpec((R, D), lambda b: (b, 0)),           # x rows
        pl.BlockSpec((Bt, S, S), lambda b: (b, 0, 0)),    # additive attn-mask bias (bf16)
        pl.BlockSpec((R, 1), lambda b: (b, 0)),           # non-pad mask rows
        full((D, H * dk)), full((1, H * dk)),             # wq, bq  (fused over heads)
        full((D, H * dk)), full((1, H * dk)),             # wk, bk
        full((D, H * dv)), full((1, H * dv)),             # wv, bv
        full((H * dv, D)), full((1, D)),                  # wo, bo
        full((1, D)), full((1, D)),                       # ln1 gamma / beta
        full((D, di)), full((1, di)),                     # conv1 (as linear) + bias
        full((di, D)), full((1, D)),                      # conv2 (as linear) + bias
        full((1, D)), full((1, D)),                       # ln2 gamma / beta
    ]
    out_specs = (
        pl.BlockSpec((R, D), lambda b: (b, 0)),              # enc_output rows
        pl.BlockSpec((H, Bt, S, S), lambda b: (0, b, 0, 0)),  # attn (head-major)
    )
    out_shapes = (
        jax.ShapeDtypeStruct((B * S, D), jnp.float32),
        jax.ShapeDtypeStruct((H, B, S, S), jnp.float32),
    )

    enc_out, attn = pl.pallas_call(
        kernel,
        grid=(B // Bt,),
        in_specs=in_specs,
        out_specs=out_specs,
        out_shape=out_shapes,
        scratch_shapes=[pltpu.VMEM((Bt, S, H * dv), jnp.float32)],
        compiler_params=pltpu.CompilerParams(
            dimension_semantics=("parallel",),
            vmem_limit_bytes=64 << 20,
        ),
    )(
        x2, attn_bias, npad2,
        params["wq"], params["bq"], params["wk"], params["bk"],
        params["wv"], params["bv"], params["wo"], params["bo"],
        params["ln1_g"], params["ln1_b"],
        params["w1"], params["b1"], params["w2"], params["b2"],
        params["ln2_g"], params["ln2_b"],
    )
    # PyTorch returns attn as (num_heads * B, S, S), head-major.
    return enc_out.reshape(B, S, D), attn.reshape(H * B, S, S)


def reference_forward(x, non_pad_mask, self_attn_mask, p):
    """Pure-JAX mirror (eval mode, same bf16-matmul / f32-accumulate precision)."""
    B, S, D = x.shape
    H, dk, dv = p["num_heads"], p["dim_key"], p["dim_value"]
    f32, bf16 = jnp.float32, jnp.bfloat16
    xb = x.astype(bf16)

    def proj(w, b, dx):
        y = jnp.einsum("bsd,de->bse", xb, w, preferred_element_type=f32) + b
        return y.reshape(B, S, H, dx)

    q = proj(p["wq"], p["bq"], dk)
    k = proj(p["wk"], p["bk"], dk)
    v = proj(p["wv"], p["bv"], dv)

    bias = jnp.where(self_attn_mask > 0, jnp.float32(_MASK_NEG), jnp.float32(0.0))
    scores = jnp.einsum("bqhd,bkhd->hbqk", q.astype(bf16), k.astype(bf16),
                        preferred_element_type=f32) / jnp.sqrt(f32(dk))
    scores = scores + bias[None]
    attn = jax.nn.softmax(scores, axis=-1)                       # (H, B, S, S)
    head_out = jnp.einsum("hbqk,bkhd->bqhd", attn.astype(bf16), v.astype(bf16),
                          preferred_element_type=f32)
    concat = head_out.reshape(B, S, H * dv)
    out = jnp.einsum("bse,ed->bsd", concat.astype(bf16), p["wo"],
                     preferred_element_type=f32) + p["bo"]
    out1 = _layer_norm(out + x, p["ln1_g"], p["ln1_b"]) * non_pad_mask

    h1 = jnp.maximum(jnp.einsum("bsd,de->bse", out1.astype(bf16), p["w1"],
                                preferred_element_type=f32) + p["b1"], 0.0)
    h2 = jnp.einsum("bse,ed->bsd", h1.astype(bf16), p["w2"],
                    preferred_element_type=f32) + p["b2"]
    out2 = _layer_norm(h2 + out1, p["ln2_g"], p["ln2_b"]) * non_pad_mask
    return out2, attn.reshape(H * B, S, S)


def make_params(key, num_heads, dim_model, dim_inner, dim_key, dim_value):
    ks = jax.random.split(key, 16)
    H, D, dk, dv, di = num_heads, dim_model, dim_key, dim_value, dim_inner
    nrm = lambda k, s, sc=0.1: sc * jax.random.normal(k, s, jnp.float32)
    bf = lambda a: a.astype(jnp.bfloat16)       # matmul weights shipped in bf16
    return {
        "num_heads": H, "dim_key": dk, "dim_value": dv, "dim_inner": di,
        "wq": bf(nrm(ks[0], (D, H * dk))), "bq": nrm(ks[1], (1, H * dk)),
        "wk": bf(nrm(ks[2], (D, H * dk))), "bk": nrm(ks[3], (1, H * dk)),
        "wv": bf(nrm(ks[4], (D, H * dv))), "bv": nrm(ks[5], (1, H * dv)),
        "wo": bf(nrm(ks[6], (H * dv, D))), "bo": nrm(ks[7], (1, D)),
        "ln1_g": 1.0 + nrm(ks[8], (1, D), 0.05), "ln1_b": nrm(ks[9], (1, D), 0.05),
        "w1": bf(nrm(ks[10], (D, di))), "b1": nrm(ks[11], (1, di)),      # Conv1d(D,di,1)^T
        "w2": bf(nrm(ks[12], (di, D), 0.2)), "b2": nrm(ks[13], (1, D)),  # Conv1d(di,D,1)^T
        "ln2_g": 1.0 + nrm(ks[14], (1, D), 0.05), "ln2_b": nrm(ks[15], (1, D), 0.05),
    }


if __name__ == "__main__":
    B, S, D = 2, 8, 32
    H, dk, dv, di = 2, 16, 16, 64

    key = jax.random.PRNGKey(0)
    kx, kp = jax.random.split(key)
    x = jax.random.normal(kx, (B, S, D), jnp.float32)

    # key-padding style mask: batch 1 has its last 2 key positions padded.
    pad = jnp.array([[0.0] * S, [0.0] * (S - 2) + [1.0, 1.0]], jnp.float32)   # (B, S)
    self_attn_mask = jnp.broadcast_to(pad[:, None, :], (B, S, S))             # >0 = masked
    non_pad_mask = (1.0 - pad)[:, :, None]                                    # (B, S, 1)

    params = make_params(kp, H, D, di, dk, dv)

    enc_out, attn = encoder_layer_forward(x, non_pad_mask, self_attn_mask, params)
    jax.block_until_ready(enc_out)
    jax.block_until_ready(attn)

    ref_out, ref_attn = reference_forward(x, non_pad_mask, self_attn_mask, params)
    np.testing.assert_allclose(np.asarray(enc_out), np.asarray(ref_out), rtol=2e-2, atol=2e-2)
    np.testing.assert_allclose(np.asarray(attn), np.asarray(ref_attn), rtol=2e-2, atol=2e-2)

    print("KERNEL_OK")
</pallas_src>

<mosaic_0001>
module attributes {stable_mosaic.version = 11 : i64} {
  func.func @encoder_layer_kernel(%arg0: i32, %arg1: memref<16x32xf32, #tpu.memory_space<vmem>>, %arg2: memref<2x8x8xbf16, #tpu.memory_space<vmem>>, %arg3: memref<16x1xf32, #tpu.memory_space<vmem>>, %arg4: memref<32x32xbf16, #tpu.memory_space<vmem>>, %arg5: memref<1x32xf32, #tpu.memory_space<vmem>>, %arg6: memref<32x32xbf16, #tpu.memory_space<vmem>>, %arg7: memref<1x32xf32, #tpu.memory_space<vmem>>, %arg8: memref<32x32xbf16, #tpu.memory_space<vmem>>, %arg9: memref<1x32xf32, #tpu.memory_space<vmem>>, %arg10: memref<32x32xbf16, #tpu.memory_space<vmem>>, %arg11: memref<1x32xf32, #tpu.memory_space<vmem>>, %arg12: memref<1x32xf32, #tpu.memory_space<vmem>>, %arg13: memref<1x32xf32, #tpu.memory_space<vmem>>, %arg14: memref<32x64xbf16, #tpu.memory_space<vmem>>, %arg15: memref<1x64xf32, #tpu.memory_space<vmem>>, %arg16: memref<64x32xbf16, #tpu.memory_space<vmem>>, %arg17: memref<1x32xf32, #tpu.memory_space<vmem>>, %arg18: memref<1x32xf32, #tpu.memory_space<vmem>>, %arg19: memref<1x32xf32, #tpu.memory_space<vmem>>, %arg20: memref<16x32xf32, #tpu.memory_space<vmem>>, %arg21: memref<2x2x8x8xf32, #tpu.memory_space<vmem>>, %arg22: memref<2x8x32xf32, #tpu.memory_space<vmem>>) attributes {dimension_semantics = [#tpu.dimension_semantics<parallel>], iteration_bounds = array<i64: 1>, scalar_prefetch = 0 : i64, scratch_operands = 1 : i64, tpu.core_type = #tpu.core_type<tc>, window_params = [{transform_indices = @transform_0, window_bounds = array<i64: 16, 32>}, {transform_indices = @transform_1, window_bounds = array<i64: 2, 8, 8>}, {transform_indices = @transform_2, window_bounds = array<i64: 16, 1>}, {pipeline_mode = #tpu.pipeline_mode<synchronous>, transform_indices = @transform_3, window_bounds = array<i64: 32, 32>}, {pipeline_mode = #tpu.pipeline_mode<synchronous>, transform_indices = @transform_4, window_bounds = array<i64: 1, 32>}, {pipeline_mode = #tpu.pipeline_mode<synchronous>, transform_indices = @transform_5, window_bounds = array<i64: 32, 32>}, {pipeline_mode = #tpu.pipeline_mode<synchronous>, transform_indices = @transform_6, window_bounds = array<i64: 1, 32>}, {pipeline_mode = #tpu.pipeline_mode<synchronous>, transform_indices = @transform_7, window_bounds = array<i64: 32, 32>}, {pipeline_mode = #tpu.pipeline_mode<synchronous>, transform_indices = @transform_8, window_bounds = array<i64: 1, 32>}, {pipeline_mode = #tpu.pipeline_mode<synchronous>, transform_indices = @transform_9, window_bounds = array<i64: 32, 32>}, {pipeline_mode = #tpu.pipeline_mode<synchronous>, transform_indices = @transform_10, window_bounds = array<i64: 1, 32>}, {pipeline_mode = #tpu.pipeline_mode<synchronous>, transform_indices = @transform_11, window_bounds = array<i64: 1, 32>}, {pipeline_mode = #tpu.pipeline_mode<synchronous>, transform_indices = @transform_12, window_bounds = array<i64: 1, 32>}, {pipeline_mode = #tpu.pipeline_mode<synchronous>, transform_indices = @transform_13, window_bounds = array<i64: 32, 64>}, {pipeline_mode = #tpu.pipeline_mode<synchronous>, transform_indices = @transform_14, window_bounds = array<i64: 1, 64>}, {pipeline_mode = #tpu.pipeline_mode<synchronous>, transform_indices = @transform_15, window_bounds = array<i64: 64, 32>}, {pipeline_mode = #tpu.pipeline_mode<synchronous>, transform_indices = @transform_16, window_bounds = array<i64: 1, 32>}, {pipeline_mode = #tpu.pipeline_mode<synchronous>, transform_indices = @transform_17, window_bounds = array<i64: 1, 32>}, {pipeline_mode = #tpu.pipeline_mode<synchronous>, transform_indices = @transform_18, window_bounds = array<i64: 1, 32>}, {transform_indices = @transform_19, window_bounds = array<i64: 16, 32>}, {transform_indices = @transform_20, window_bounds = array<i64: 2, 2, 8, 8>}]} {
    %c0 = arith.constant 0 : index
    %c0_0 = arith.constant 0 : index
    %0 = vector.load %arg1[%c0, %c0_0] : memref<16x32xf32, #tpu.memory_space<vmem>>, vector<16x32xf32>
    %c0_1 = arith.constant 0 : index
    %c0_2 = arith.constant 0 : index
    %1 = vector.load %arg3[%c0_1, %c0_2] : memref<16x1xf32, #tpu.memory_space<vmem>>, vector<16x1xf32>
    %2 = arith.truncf %0 : vector<16x32xf32> to vector<16x32xbf16>
    %c0_3 = arith.constant 0 : index
    %c0_4 = arith.constant 0 : index
    %3 = vector.load %arg4[%c0_3, %c0_4] : memref<32x32xbf16, #tpu.memory_space<vmem>>, vector<32x32xbf16>
    %cst = arith.constant dense<0.000000e+00> : vector<16x32xf32>
    %4 = tpu.matmul %2, %3, %cst {dimension_numbers = #tpu.dot_dimension_numbers<[1], [0], [0], [1], [0, 0, 1, 1], [], []>} : vector<16x32xbf16>, vector<32x32xbf16>, vector<16x32xf32> -> vector<16x32xf32>
    %c0_5 = arith.constant 0 : index
    %c0_6 = arith.constant 0 : index
    %5 = vector.load %arg5[%c0_5, %c0_6] : memref<1x32xf32, #tpu.memory_space<vmem>>, vector<1x32xf32>
    %6 = vector.broadcast %5 : vector<1x32xf32> to vector<16x32xf32>
    %7 = arith.addf %4, %6 : vector<16x32xf32>
    %c0_7 = arith.constant 0 : index
    %c0_8 = arith.constant 0 : index
    %8 = vector.load %arg6[%c0_7, %c0_8] : memref<32x32xbf16, #tpu.memory_space<vmem>>, vector<32x32xbf16>
    %cst_9 = arith.constant dense<0.000000e+00> : vector<16x32xf32>
    %9 = tpu.matmul %2, %8, %cst_9 {dimension_numbers = #tpu.dot_dimension_numbers<[1], [0], [0], [1], [0, 0, 1, 1], [], []>} : vector<16x32xbf16>, vector<32x32xbf16>, vector<16x32xf32> -> vector<16x32xf32>
    %c0_10 = arith.constant 0 : index
    %c0_11 = arith.constant 0 : index
    %10 = vector.load %arg7[%c0_10, %c0_11] : memref<1x32xf32, #tpu.memory_space<vmem>>, vector<1x32xf32>
    %11 = vector.broadcast %10 : vector<1x32xf32> to vector<16x32xf32>
    %12 = arith.addf %9, %11 : vector<16x32xf32>
    %c0_12 = arith.constant 0 : index
    %c0_13 = arith.constant 0 : index
    %13 = vector.load %arg8[%c0_12, %c0_13] : memref<32x32xbf16, #tpu.memory_space<vmem>>, vector<32x32xbf16>
    %cst_14 = arith.constant dense<0.000000e+00> : vector<16x32xf32>
    %14 = tpu.matmul %2, %13, %cst_14 {dimension_numbers = #tpu.dot_dimension_numbers<[1], [0], [0], [1], [0, 0, 1, 1], [], []>} : vector<16x32xbf16>, vector<32x32xbf16>, vector<16x32xf32> -> vector<16x32xf32>
    %c0_15 = arith.constant 0 : index
    %c0_16 = arith.constant 0 : index
    %15 = vector.load %arg9[%c0_15, %c0_16] : memref<1x32xf32, #tpu.memory_space<vmem>>, vector<1x32xf32>
    %16 = vector.broadcast %15 : vector<1x32xf32> to vector<16x32xf32>
    %17 = arith.addf %14, %16 : vector<16x32xf32>
    %18 = vector.shape_cast %7 : vector<16x32xf32> to vector<2x8x32xf32>
    %19 = vector.shape_cast %12 : vector<16x32xf32> to vector<2x8x32xf32>
    %20 = vector.shape_cast %17 : vector<16x32xf32> to vector<2x8x32xf32>
    %c0_17 = arith.constant 0 : index
    %c0_18 = arith.constant 0 : index
    %c0_19 = arith.constant 0 : index
    %21 = vector.load %arg2[%c0_17, %c0_18, %c0_19] : memref<2x8x8xbf16, #tpu.memory_space<vmem>>, vector<2x8x8xbf16>
    %22 = arith.extf %21 : vector<2x8x8xbf16> to vector<2x8x8xf32>
    %23 = vector.extract_strided_slice %18 {offsets = [0, 0, 0], sizes = [2, 8, 16], strides = [1, 1, 1]} : vector<2x8x32xf32> to vector<2x8x16xf32>
    %24 = arith.truncf %23 : vector<2x8x16xf32> to vector<2x8x16xbf16>
    %25 = vector.extract_strided_slice %19 {offsets = [0, 0, 0], sizes = [2, 8, 16], strides = [1, 1, 1]} : vector<2x8x32xf32> to vector<2x8x16xf32>
    %26 = arith.truncf %25 : vector<2x8x16xf32> to vector<2x8x16xbf16>
    %27 = vector.extract_strided_slice %20 {offsets = [0, 0, 0], sizes = [2, 8, 16], strides = [1, 1, 1]} : vector<2x8x32xf32> to vector<2x8x16xf32>
    %28 = arith.truncf %27 : vector<2x8x16xf32> to vector<2x8x16xbf16>
    "tpu.trace_start"() <{level = 10 : i32, message = "bqd,bkd->bqk"}> : () -> ()
    %cst_20 = arith.constant dense<0.000000e+00> : vector<2x8x8xf32>
    %29 = tpu.matmul %24, %26, %cst_20 {dimension_numbers = #tpu.dot_dimension_numbers<[2], [2], [1], [1], [0, 0, 0, 1, 1, 1], [0], [0]>} : vector<2x8x16xbf16>, vector<2x8x16xbf16>, vector<2x8x8xf32> -> vector<2x8x8xf32>
    "tpu.trace_stop"() : () -> ()
    %cst_21 = arith.constant 2.500000e-01 : f32
    %30 = vector.broadcast %cst_21 : f32 to vector<2x8x8xf32>
    %31 = arith.mulf %29, %30 : vector<2x8x8xf32>
    %32 = arith.addf %31, %22 : vector<2x8x8xf32>
    %cst_22 = arith.constant dense<0xFF800000> : vector<2x8xf32>
    %33 = vector.multi_reduction <maximumf>, %32, %cst_22 [2] : vector<2x8x8xf32> to vector<2x8xf32>
    %34 = vector.shape_cast %33 : vector<2x8xf32> to vector<2x8x1xf32>
    %35 = vector.broadcast %34 : vector<2x8x1xf32> to vector<2x8x8xf32>
    %36 = arith.subf %32, %35 : vector<2x8x8xf32>
    %37 = math.exp %36 : vector<2x8x8xf32>
    %cst_23 = arith.constant dense<0.000000e+00> : vector<2x8xf32>
    %38 = vector.multi_reduction <add>, %37, %cst_23 [2] : vector<2x8x8xf32> to vector<2x8xf32>
    %39 = vector.shape_cast %38 : vector<2x8xf32> to vector<2x8x1xf32>
    %40 = tpu.reciprocal %39 {approx = true} : vector<2x8x1xf32> -> vector<2x8x1xf32>
    %41 = vector.broadcast %40 : vector<2x8x1xf32> to vector<2x8x8xf32>
    %42 = arith.mulf %37, %41 : vector<2x8x8xf32>
    %c0_24 = arith.constant 0 : index
    %c0_25 = arith.constant 0 : index
    %c0_26 = arith.constant 0 : index
    %c0_27 = arith.constant 0 : index
    %43 = vector.load %arg21[%c0_24, %c0_25, %c0_26, %c0_27] : memref<2x2x8x8xf32, #tpu.memory_space<vmem>>, vector<1x2x8x8xf32>
    %44 = vector.shape_cast %43 : vector<1x2x8x8xf32> to vector<2x8x8xf32>
    %45 = vector.shape_cast %42 : vector<2x8x8xf32> to vector<1x2x8x8xf32>
    tpu.vector_store %arg21[%c0_24, %c0_25, %c0_26, %c0_27], %45 {strides = array<i32>} : memref<2x2x8x8xf32, #tpu.memory_space<vmem>>, vector<1x2x8x8xf32>,
    %46 = arith.truncf %42 : vector<2x8x8xf32> to vector<2x8x8xbf16>
    "tpu.trace_start"() <{level = 10 : i32, message = "bqk,bkd->bqd"}> : () -> ()
    %cst_28 = arith.constant dense<0.000000e+00> : vector<2x8x16xf32>
    %47 = tpu.matmul %46, %28, %cst_28 {dimension_numbers = #tpu.dot_dimension_numbers<[2], [1], [1], [2], [0, 0, 0, 1, 1, 2], [0], [0]>} : vector<2x8x8xbf16>, vector<2x8x16xbf16>, vector<2x8x16xf32> -> vector<2x8x16xf32>
    "tpu.trace_stop"() : () -> ()
    %c0_29 = arith.constant 0 : index
    %c0_30 = arith.constant 0 : index
    %c0_31 = arith.constant 0 : index
    %48 = vector.load %arg22[%c0_29, %c0_30, %c0_31] : memref<2x8x32xf32, #tpu.memory_space<vmem>>, vector<2x8x16xf32>
    tpu.vector_store %arg22[%c0_29, %c0_30, %c0_31], %47 {strides = array<i32>} : memref<2x8x32xf32, #tpu.memory_space<vmem>>, vector<2x8x16xf32>,
    %49 = vector.extract_strided_slice %18 {offsets = [0, 0, 16], sizes = [2, 8, 16], strides = [1, 1, 1]} : vector<2x8x32xf32> to vector<2x8x16xf32>
    %50 = arith.truncf %49 : vector<2x8x16xf32> to vector<2x8x16xbf16>
    %51 = vector.extract_strided_slice %19 {offsets = [0, 0, 16], sizes = [2, 8, 16], strides = [1, 1, 1]} : vector<2x8x32xf32> to vector<2x8x16xf32>
    %52 = arith.truncf %51 : vector<2x8x16xf32> to vector<2x8x16xbf16>
    %53 = vector.extract_strided_slice %20 {offsets = [0, 0, 16], sizes = [2, 8, 16], strides = [1, 1, 1]} : vector<2x8x32xf32> to vector<2x8x16xf32>
    %54 = arith.truncf %53 : vector<2x8x16xf32> to vector<2x8x16xbf16>
    "tpu.trace_start"() <{level = 10 : i32, message = "bqd,bkd->bqk"}> : () -> ()
    %cst_32 = arith.constant dense<0.000000e+00> : vector<2x8x8xf32>
    %55 = tpu.matmul %50, %52, %cst_32 {dimension_numbers = #tpu.dot_dimension_numbers<[2], [2], [1], [1], [0, 0, 0, 1, 1, 1], [0], [0]>} : vector<2x8x16xbf16>, vector<2x8x16xbf16>, vector<2x8x8xf32> -> vector<2x8x8xf32>
    "tpu.trace_stop"() : () -> ()
    %cst_33 = arith.constant 2.500000e-01 : f32
    %56 = vector.broadcast %cst_33 : f32 to vector<2x8x8xf32>
    %57 = arith.mulf %55, %56 : vector<2x8x8xf32>
    %58 = arith.addf %57, %22 : vector<2x8x8xf32>
    %cst_34 = arith.constant dense<0xFF800000> : vector<2x8xf32>
    %59 = vector.multi_reduction <maximumf>, %58, %cst_34 [2] : vector<2x8x8xf32> to vector<2x8xf32>
    %60 = vector.shape_cast %59 : vector<2x8xf32> to vector<2x8x1xf32>
    %61 = vector.broadcast %60 : vector<2x8x1xf32> to vector<2x8x8xf32>
    %62 = arith.subf %58, %61 : vector<2x8x8xf32>
    %63 = math.exp %62 : vector<2x8x8xf32>
    %cst_35 = arith.constant dense<0.000000e+00> : vector<2x8xf32>
    %64 = vector.multi_reduction <add>, %63, %cst_35 [2] : vector<2x8x8xf32> to vector<2x8xf32>
    %65 = vector.shape_cast %64 : vector<2x8xf32> to vector<2x8x1xf32>
    %66 = tpu.reciprocal %65 {approx = true} : vector<2x8x1xf32> -> vector<2x8x1xf32>
    %67 = vector.broadcast %66 : vector<2x8x1xf32> to vector<2x8x8xf32>
    %68 = arith.mulf %63, %67 : vector<2x8x8xf32>
    %c1 = arith.constant 1 : index
    %c0_36 = arith.constant 0 : index
    %c0_37 = arith.constant 0 : index
    %c0_38 = arith.constant 0 : index
    %69 = vector.load %arg21[%c1, %c0_36, %c0_37, %c0_38] : memref<2x2x8x8xf32, #tpu.memory_space<vmem>>, vector<1x2x8x8xf32>
    %70 = vector.shape_cast %69 : vector<1x2x8x8xf32> to vector<2x8x8xf32>
    %71 = vector.shape_cast %68 : vector<2x8x8xf32> to vector<1x2x8x8xf32>
    tpu.vector_store %arg21[%c1, %c0_36, %c0_37, %c0_38], %71 {strides = array<i32>} : memref<2x2x8x8xf32, #tpu.memory_space<vmem>>, vector<1x2x8x8xf32>,
    %72 = arith.truncf %68 : vector<2x8x8xf32> to vector<2x8x8xbf16>
    "tpu.trace_start"() <{level = 10 : i32, message = "bqk,bkd->bqd"}> : () -> ()
    %cst_39 = arith.constant dense<0.000000e+00> : vector<2x8x16xf32>
    %73 = tpu.matmul %72, %54, %cst_39 {dimension_numbers = #tpu.dot_dimension_numbers<[2], [1], [1], [2], [0, 0, 0, 1, 1, 2], [0], [0]>} : vector<2x8x8xbf16>, vector<2x8x16xbf16>, vector<2x8x16xf32> -> vector<2x8x16xf32>
    "tpu.trace_stop"() : () -> ()
    %c0_40 = arith.constant 0 : index
    %c0_41 = arith.constant 0 : index
    %c16 = arith.constant 16 : index
    %74 = vector.load %arg22[%c0_40, %c0_41, %c16] : memref<2x8x32xf32, #tpu.memory_space<vmem>>, vector<2x8x16xf32>
    tpu.vector_store %arg22[%c0_40, %c0_41, %c16], %73 {strides = array<i32>} : memref<2x8x32xf32, #tpu.memory_space<vmem>>, vector<2x8x16xf32>,
    %c0_42 = arith.constant 0 : index
    %c0_43 = arith.constant 0 : index
    %c0_44 = arith.constant 0 : index
    %75 = vector.load %arg22[%c0_42, %c0_43, %c0_44] : memref<2x8x32xf32, #tpu.memory_space<vmem>>, vector<2x8x32xf32>
    %76 = vector.shape_cast %75 : vector<2x8x32xf32> to vector<16x32xf32>
    %77 = arith.truncf %76 : vector<16x32xf32> to vector<16x32xbf16>
    %c0_45 = arith.constant 0 : index
    %c0_46 = arith.constant 0 : index
    %78 = vector.load %arg10[%c0_45, %c0_46] : memref<32x32xbf16, #tpu.memory_space<vmem>>, vector<32x32xbf16>
    %cst_47 = arith.constant dense<0.000000e+00> : vector<16x32xf32>
    %79 = tpu.matmul %77, %78, %cst_47 {dimension_numbers = #tpu.dot_dimension_numbers<[1], [0], [0], [1], [0, 0, 1, 1], [], []>} : vector<16x32xbf16>, vector<32x32xbf16>, vector<16x32xf32> -> vector<16x32xf32>
    %c0_48 = arith.constant 0 : index
    %c0_49 = arith.constant 0 : index
    %80 = vector.load %arg11[%c0_48, %c0_49] : memref<1x32xf32, #tpu.memory_space<vmem>>, vector<1x32xf32>
    %81 = vector.broadcast %80 : vector<1x32xf32> to vector<16x32xf32>
    %82 = arith.addf %79, %81 : vector<16x32xf32>
    %83 = arith.addf %82, %0 : vector<16x32xf32>
    %c0_50 = arith.constant 0 : index
    %c0_51 = arith.constant 0 : index
    %84 = vector.load %arg12[%c0_50, %c0_51] : memref<1x32xf32, #tpu.memory_space<vmem>>, vector<1x32xf32>
    %c0_52 = arith.constant 0 : index
    %c0_53 = arith.constant 0 : index
    %85 = vector.load %arg13[%c0_52, %c0_53] : memref<1x32xf32, #tpu.memory_space<vmem>>, vector<1x32xf32>
    %cst_54 = arith.constant dense<0.000000e+00> : vector<16xf32>
    %86 = vector.multi_reduction <add>, %83, %cst_54 [1] : vector<16x32xf32> to vector<16xf32>
    %87 = vector.shape_cast %86 : vector<16xf32> to vector<16x1xf32>
    %cst_55 = arith.constant 3.200000e+01 : f32
    %88 = vector.broadcast %cst_55 : f32 to vector<16x1xf32>
    %89 = arith.divf %87, %88 : vector<16x1xf32>
    %90 = vector.broadcast %89 : vector<16x1xf32> to vector<16x32xf32>
    %91 = arith.subf %83, %90 : vector<16x32xf32>
    %92 = arith.mulf %91, %91 : vector<16x32xf32>
    %cst_56 = arith.constant dense<0.000000e+00> : vector<16xf32>
    %93 = vector.multi_reduction <add>, %92, %cst_56 [1] : vector<16x32xf32> to vector<16xf32>
    %94 = vector.shape_cast %93 : vector<16xf32> to vector<16x1xf32>
    %cst_57 = arith.constant 3.200000e+01 : f32
    %95 = vector.broadcast %cst_57 : f32 to vector<16x1xf32>
    %96 = arith.divf %94, %95 : vector<16x1xf32>
    %97 = vector.broadcast %89 : vector<16x1xf32> to vector<16x32xf32>
    %98 = arith.subf %83, %97 : vector<16x32xf32>
    %cst_58 = arith.constant 9.99999974E-6 : f32
    %99 = vector.broadcast %cst_58 : f32 to vector<16x1xf32>
    %100 = arith.addf %96, %99 : vector<16x1xf32>
    %101 = math.rsqrt %100 : vector<16x1xf32>
    %102 = vector.broadcast %101 : vector<16x1xf32> to vector<16x32xf32>
    %103 = arith.mulf %98, %102 : vector<16x32xf32>
    %104 = vector.broadcast %84 : vector<1x32xf32> to vector<16x32xf32>
    %105 = arith.mulf %103, %104 : vector<16x32xf32>
    %106 = vector.broadcast %85 : vector<1x32xf32> to vector<16x32xf32>
    %107 = arith.addf %105, %106 : vector<16x32xf32>
    %108 = vector.broadcast %1 : vector<16x1xf32> to vector<16x32xf32>
    %109 = arith.mulf %107, %108 : vector<16x32xf32>
    %110 = arith.truncf %109 : vector<16x32xf32> to vector<16x32xbf16>
    %c0_59 = arith.constant 0 : index
    %c0_60 = arith.constant 0 : index
    %111 = vector.load %arg14[%c0_59, %c0_60] : memref<32x64xbf16, #tpu.memory_space<vmem>>, vector<32x64xbf16>
    %cst_61 = arith.constant dense<0.000000e+00> : vector<16x64xf32>
    %112 = tpu.matmul %110, %111, %cst_61 {dimension_numbers = #tpu.dot_dimension_numbers<[1], [0], [0], [1], [0, 0, 1, 1], [], []>} : vector<16x32xbf16>, vector<32x64xbf16>, vector<16x64xf32> -> vector<16x64xf32>
    %c0_62 = arith.constant 0 : index
    %c0_63 = arith.constant 0 : index
    %113 = vector.load %arg15[%c0_62, %c0_63] : memref<1x64xf32, #tpu.memory_space<vmem>>, vector<1x64xf32>
    %114 = vector.broadcast %113 : vector<1x64xf32> to vector<16x64xf32>
    %115 = arith.addf %112, %114 : vector<16x64xf32>
    %cst_64 = arith.constant 0.000000e+00 : f32
    %116 = vector.broadcast %cst_64 : f32 to vector<16x64xf32>
    %117 = arith.maximumf %115, %116 : vector<16x64xf32>
    %118 = arith.truncf %117 : vector<16x64xf32> to vector<16x64xbf16>
    %c0_65 = arith.constant 0 : index
    %c0_66 = arith.constant 0 : index
    %119 = vector.load %arg16[%c0_65, %c0_66] : memref<64x32xbf16, #tpu.memory_space<vmem>>, vector<64x32xbf16>
    %cst_67 = arith.constant dense<0.000000e+00> : vector<16x32xf32>
    %120 = tpu.matmul %118, %119, %cst_67 {dimension_numbers = #tpu.dot_dimension_numbers<[1], [0], [0], [1], [0, 0, 1, 1], [], []>} : vector<16x64xbf16>, vector<64x32xbf16>, vector<16x32xf32> -> vector<16x32xf32>
    %c0_68 = arith.constant 0 : index
    %c0_69 = arith.constant 0 : index
    %121 = vector.load %arg17[%c0_68, %c0_69] : memref<1x32xf32, #tpu.memory_space<vmem>>, vector<1x32xf32>
    %122 = vector.broadcast %121 : vector<1x32xf32> to vector<16x32xf32>
    %123 = arith.addf %120, %122 : vector<16x32xf32>
    %124 = arith.addf %123, %109 : vector<16x32xf32>
    %c0_70 = arith.constant 0 : index
    %c0_71 = arith.constant 0 : index
    %125 = vector.load %arg18[%c0_70, %c0_71] : memref<1x32xf32, #tpu.memory_space<vmem>>, vector<1x32xf32>
    %c0_72 = arith.constant 0 : index
    %c0_73 = arith.constant 0 : index
    %126 = vector.load %arg19[%c0_72, %c0_73] : memref<1x32xf32, #tpu.memory_space<vmem>>, vector<1x32xf32>
    %cst_74 = arith.constant dense<0.000000e+00> : vector<16xf32>
    %127 = vector.multi_reduction <add>, %124, %cst_74 [1] : vector<16x32xf32> to vector<16xf32>
    %128 = vector.shape_cast %127 : vector<16xf32> to vector<16x1xf32>
    %cst_75 = arith.constant 3.200000e+01 : f32
    %129 = vector.broadcast %cst_75 : f32 to vector<16x1xf32>
    %130 = arith.divf %128, %129 : vector<16x1xf32>
    %131 = vector.broadcast %130 : vector<16x1xf32> to vector<16x32xf32>
    %132 = arith.subf %124, %131 : vector<16x32xf32>
    %133 = arith.mulf %132, %132 : vector<16x32xf32>
    %cst_76 = arith.constant dense<0.000000e+00> : vector<16xf32>
    %134 = vector.multi_reduction <add>, %133, %cst_76 [1] : vector<16x32xf32> to vector<16xf32>
    %135 = vector.shape_cast %134 : vector<16xf32> to vector<16x1xf32>
    %cst_77 = arith.constant 3.200000e+01 : f32
    %136 = vector.broadcast %cst_77 : f32 to vector<16x1xf32>
    %137 = arith.divf %135, %136 : vector<16x1xf32>
    %138 = vector.broadcast %130 : vector<16x1xf32> to vector<16x32xf32>
    %139 = arith.subf %124, %138 : vector<16x32xf32>
    %cst_78 = arith.constant 9.99999974E-6 : f32
    %140 = vector.broadcast %cst_78 : f32 to vector<16x1xf32>
    %141 = arith.addf %137, %140 : vector<16x1xf32>
    %142 = math.rsqrt %141 : vector<16x1xf32>
    %143 = vector.broadcast %142 : vector<16x1xf32> to vector<16x32xf32>
    %144 = arith.mulf %139, %143 : vector<16x32xf32>
    %145 = vector.broadcast %125 : vector<1x32xf32> to vector<16x32xf32>
    %146 = arith.mulf %144, %145 : vector<16x32xf32>
    %147 = vector.broadcast %126 : vector<1x32xf32> to vector<16x32xf32>
    %148 = arith.addf %146, %147 : vector<16x32xf32>
    %149 = vector.broadcast %1 : vector<16x1xf32> to vector<16x32xf32>
    %150 = arith.mulf %148, %149 : vector<16x32xf32>
    %c0_79 = arith.constant 0 : index
    %c0_80 = arith.constant 0 : index
    %151 = vector.load %arg20[%c0_79, %c0_80] : memref<16x32xf32, #tpu.memory_space<vmem>>, vector<16x32xf32>
    tpu.vector_store %arg20[%c0_79, %c0_80], %150 {strides = array<i32>} : memref<16x32xf32, #tpu.memory_space<vmem>>, vector<16x32xf32>,
    return
  }
  func.func @transform_0(%arg0: i32) -> (i32, i32) {
    %c0_i32 = arith.constant 0 : i32
    %c0_i32_0 = arith.constant 0 : i32
    return %arg0, %c0_i32 : i32, i32
  }
  func.func @transform_1(%arg0: i32) -> (i32, i32, i32) {
    %c0_i32 = arith.constant 0 : i32
    %c0_i32_0 = arith.constant 0 : i32
    %c0_i32_1 = arith.constant 0 : i32
    return %arg0, %c0_i32, %c0_i32_0 : i32, i32, i32
  }
  func.func @transform_2(%arg0: i32) -> (i32, i32) {
    %c0_i32 = arith.constant 0 : i32
    %c0_i32_0 = arith.constant 0 : i32
    return %arg0, %c0_i32 : i32, i32
  }
  func.func @transform_3(%arg0: i32) -> (i32, i32) {
    %c0_i32 = arith.constant 0 : i32
    %c0_i32_0 = arith.constant 0 : i32
    %c0_i32_1 = arith.constant 0 : i32
    return %c0_i32, %c0_i32_0 : i32, i32
  }
  func.func @transform_4(%arg0: i32) -> (i32, i32) {
    %c0_i32 = arith.constant 0 : i32
    %c0_i32_0 = arith.constant 0 : i32
    %c0_i32_1 = arith.constant 0 : i32
    return %c0_i32, %c0_i32_0 : i32, i32
  }
  func.func @transform_5(%arg0: i32) -> (i32, i32) {
    %c0_i32 = arith.constant 0 : i32
    %c0_i32_0 = arith.constant 0 : i32
    %c0_i32_1 = arith.constant 0 : i32
    return %c0_i32, %c0_i32_0 : i32, i32
  }
  func.func @transform_6(%arg0: i32) -> (i32, i32) {
    %c0_i32 = arith.constant 0 : i32
    %c0_i32_0 = arith.constant 0 : i32
    %c0_i32_1 = arith.constant 0 : i32
    return %c0_i32, %c0_i32_0 : i32, i32
  }
  func.func @transform_7(%arg0: i32) -> (i32, i32) {
    %c0_i32 = arith.constant 0 : i32
    %c0_i32_0 = arith.constant 0 : i32
    %c0_i32_1 = arith.constant 0 : i32
    return %c0_i32, %c0_i32_0 : i32, i32
  }
  func.func @transform_8(%arg0: i32) -> (i32, i32) {
    %c0_i32 = arith.constant 0 : i32
    %c0_i32_0 = arith.constant 0 : i32
    %c0_i32_1 = arith.constant 0 : i32
    return %c0_i32, %c0_i32_0 : i32, i32
  }
  func.func @transform_9(%arg0: i32) -> (i32, i32) {
    %c0_i32 = arith.constant 0 : i32
    %c0_i32_0 = arith.constant 0 : i32
    %c0_i32_1 = arith.constant 0 : i32
    return %c0_i32, %c0_i32_0 : i32, i32
  }
  func.func @transform_10(%arg0: i32) -> (i32, i32) {
    %c0_i32 = arith.constant 0 : i32
    %c0_i32_0 = arith.constant 0 : i32
    %c0_i32_1 = arith.constant 0 : i32
    return %c0_i32, %c0_i32_0 : i32, i32
  }
  func.func @transform_11(%arg0: i32) -> (i32, i32) {
    %c0_i32 = arith.constant 0 : i32
    %c0_i32_0 = arith.constant 0 : i32
    %c0_i32_1 = arith.constant 0 : i32
    return %c0_i32, %c0_i32_0 : i32, i32
  }
  func.func @transform_12(%arg0: i32) -> (i32, i32) {
    %c0_i32 = arith.constant 0 : i32
    %c0_i32_0 = arith.constant 0 : i32
    %c0_i32_1 = arith.constant 0 : i32
    return %c0_i32, %c0_i32_0 : i32, i32
  }
  func.func @transform_13(%arg0: i32) -> (i32, i32) {
    %c0_i32 = arith.constant 0 : i32
    %c0_i32_0 = arith.constant 0 : i32
    %c0_i32_1 = arith.constant 0 : i32
    return %c0_i32, %c0_i32_0 : i32, i32
  }
  func.func @transform_14(%arg0: i32) -> (i32, i32) {
    %c0_i32 = arith.constant 0 : i32
    %c0_i32_0 = arith.constant 0 : i32
    %c0_i32_1 = arith.constant 0 : i32
    return %c0_i32, %c0_i32_0 : i32, i32
  }
  func.func @transform_15(%arg0: i32) -> (i32, i32) {
    %c0_i32 = arith.constant 0 : i32
    %c0_i32_0 = arith.constant 0 : i32
    %c0_i32_1 = arith.constant 0 : i32
    return %c0_i32, %c0_i32_0 : i32, i32
  }
  func.func @transform_16(%arg0: i32) -> (i32, i32) {
    %c0_i32 = arith.constant 0 : i32
    %c0_i32_0 = arith.constant 0 : i32
    %c0_i32_1 = arith.constant 0 : i32
    return %c0_i32, %c0_i32_0 : i32, i32
  }
  func.func @transform_17(%arg0: i32) -> (i32, i32) {
    %c0_i32 = arith.constant 0 : i32
    %c0_i32_0 = arith.constant 0 : i32
    %c0_i32_1 = arith.constant 0 : i32
    return %c0_i32, %c0_i32_0 : i32, i32
  }
  func.func @transform_18(%arg0: i32) -> (i32, i32) {
    %c0_i32 = arith.constant 0 : i32
    %c0_i32_0 = arith.constant 0 : i32
    %c0_i32_1 = arith.constant 0 : i32
    return %c0_i32, %c0_i32_0 : i32, i32
  }
  func.func @transform_19(%arg0: i32) -> (i32, i32) {
    %c0_i32 = arith.constant 0 : i32
    %c0_i32_0 = arith.constant 0 : i32
    return %arg0, %c0_i32 : i32, i32
  }
  func.func @transform_20(%arg0: i32) -> (i32, i32, i32, i32) {
    %c0_i32 = arith.constant 0 : i32
    %c0_i32_0 = arith.constant 0 : i32
    %c0_i32_1 = arith.constant 0 : i32
    %c0_i32_2 = arith.constant 0 : i32
    return %c0_i32, %arg0, %c0_i32_0, %c0_i32_1 : i32, i32, i32, i32
  }
}

</mosaic_0001>

<llo_original>
// kernel: tpu_custom_call.1
$region0: #{tpu_custom_call.1}
  #allocation0 [shape = 'u32[]', space=smem, size = 0x4, offset = 0x4, fixed_abs, tag = 'smem constant byte address 0x4 - core index']
  #allocation1 [shape = 'u32[144,128]{1,0:T(1,128)}', space=vmem, size = 0x12000, scoped, tag = 'internal scratch']
  #allocation2 [shape = 'f32[2,8,32]{2,1,0:T(8,128)}', space=vmem, size = 0x2000, scoped, tag = 'scratch operand']
  %s0 = inlined_call_operand.hbm [shape: f32[16,32], index: 0, kind: input, shape index: {}]
  %s1 = inlined_call_operand.hbm [shape: bf16[2,8,8], index: 1, kind: input, shape index: {}]
  %s2 = inlined_call_operand.hbm [shape: f32[16,1], index: 2, kind: input, shape index: {}]
  %s3 = inlined_call_operand.hbm [shape: bf16[32,32], index: 3, kind: input, shape index: {}]
  %s4 = inlined_call_operand.hbm [shape: f32[1,32], index: 4, kind: input, shape index: {}]
  %s5 = inlined_call_operand.hbm [shape: bf16[32,32], index: 5, kind: input, shape index: {}]
  %s6 = inlined_call_operand.hbm [shape: f32[1,32], index: 6, kind: input, shape index: {}]
  %s7 = inlined_call_operand.hbm [shape: bf16[32,32], index: 7, kind: input, shape index: {}]
  %s8 = inlined_call_operand.hbm [shape: f32[1,32], index: 8, kind: input, shape index: {}]
  %s9 = inlined_call_operand.hbm [shape: bf16[32,32], index: 9, kind: input, shape index: {}]
  %s10 = inlined_call_operand.hbm [shape: f32[1,32], index: 10, kind: input, shape index: {}]
  %s11 = inlined_call_operand.hbm [shape: f32[1,32], index: 11, kind: input, shape index: {}]
  %s12 = inlined_call_operand.hbm [shape: f32[1,32], index: 12, kind: input, shape index: {}]
  %s13 = inlined_call_operand.hbm [shape: bf16[32,64], index: 13, kind: input, shape index: {}]
  %s14 = inlined_call_operand.hbm [shape: f32[1,64], index: 14, kind: input, shape index: {}]
  %s15 = inlined_call_operand.hbm [shape: bf16[64,32], index: 15, kind: input, shape index: {}]
  %s16 = inlined_call_operand.hbm [shape: f32[1,32], index: 16, kind: input, shape index: {}]
  %s17 = inlined_call_operand.hbm [shape: f32[1,32], index: 17, kind: input, shape index: {}]
  %s18 = inlined_call_operand.hbm [shape: f32[1,32], index: 18, kind: input, shape index: {}]
  %s19 = inlined_call_operand.hbm [shape: f32[16,32], index: 19, kind: output, shape index: {0}]
  %s20 = inlined_call_operand.hbm [shape: f32[2,2,8,8], index: 20, kind: output, shape index: {1}]
  %21 = xla_tuple %s19, %s20
  %s22 = sld [smem:[#allocation0]]
  $region170: #{tpu_custom_call.1} parent=0
    _
  %s24 = ssub.s32 1, %s22
  %s25 = scalar_select 0, %s24, %s22
  $region1: #{tpu_custom_call.1} parent=0
    #allocation3 [shape = 'u8[8192]{0}', space=vmem, size = 0x2000, scoped, tag = 'input window, operand 0, single buffered']
    #allocation4 [shape = 's32[1]{0}', space=sflag, size = 0x4, scoped, tag = 'scoped memory for tpu_custom_call.1']
    #allocation5 [shape = 's32[1]{0}', space=sflag, size = 0x4, scoped, tag = 'scoped memory for tpu_custom_call.1']
    #allocation6 [shape = 'u8[4096]{0}', space=vmem, size = 0x1000, scoped, tag = 'input window, operand 1, single buffered']
    #allocation7 [shape = 's32[1]{0}', space=sflag, size = 0x4, scoped, tag = 'scoped memory for tpu_custom_call.1']
    #allocation8 [shape = 'u8[8192]{0}', space=vmem, size = 0x2000, scoped, tag = 'input window, operand 2, single buffered']
    #allocation9 [shape = 'u8[8192]{0}', space=vmem, size = 0x2000, scoped, tag = 'input window, operand 3, single buffered']
    #allocation10 [shape = 's32[1]{0}', space=sflag, size = 0x4, scoped, tag = 'scoped memory for tpu_custom_call.1']
    #allocation11 [shape = 'u8[512]{0}', space=vmem, size = 0x400, scoped, tag = 'input window, operand 4, single buffered']
    #allocation12 [shape = 'u8[8192]{0}', space=vmem, size = 0x2000, scoped, tag = 'input window, operand 5, single buffered']
    #allocation13 [shape = 's32[1]{0}', space=sflag, size = 0x4, scoped, tag = 'scoped memory for tpu_custom_call.1']
    #allocation14 [shape = 'u8[512]{0}', space=vmem, size = 0x400, scoped, tag = 'input window, operand 6, single buffered']
    #allocation15 [shape = 'u8[8192]{0}', space=vmem, size = 0x2000, scoped, tag = 'input window, operand 7, single buffered']
    #allocation16 [shape = 's32[1]{0}', space=sflag, size = 0x4, scoped, tag = 'scoped memory for tpu_custom_call.1']
    #allocation17 [shape = 'u8[512]{0}', space=vmem, size = 0x400, scoped, tag = 'input window, operand 8, single buffered']
    #allocation18 [shape = 'u8[8192]{0}', space=vmem, size = 0x2000, scoped, tag = 'input window, operand 9, single buffered']
    #allocation19 [shape = 's32[1]{0}', space=sflag, size = 0x4, scoped, tag = 'scoped memory for tpu_custom_call.1']
    #allocation20 [shape = 'u8[512]{0}', space=vmem, size = 0x400, scoped, tag = 'input window, operand 10, single buffered']
    #allocation21 [shape = 'u8[512]{0}', space=vmem, size = 0x400, scoped, tag = 'input window, operand 11, single buffered']
    #allocation22 [shape = 's32[1]{0}', space=sflag, size = 0x4, scoped, tag = 'scoped memory for tpu_custom_call.1']
    #allocation23 [shape = 'u8[512]{0}', space=vmem, size = 0x400, scoped, tag = 'input window, operand 12, single buffered']
    #allocation24 [shape = 'u8[8192]{0}', space=vmem, size = 0x2000, scoped, tag = 'input window, operand 13, single buffered']
    #allocation25 [shape = 's32[1]{0}', space=sflag, size = 0x4, scoped, tag = 'scoped memory for tpu_custom_call.1']
    #allocation26 [shape = 'u8[512]{0}', space=vmem, size = 0x400, scoped, tag = 'input window, operand 14, single buffered']
    #allocation27 [shape = 'u8[16384]{0}', space=vmem, size = 0x4000, scoped, tag = 'input window, operand 15, single buffered']
    #allocation28 [shape = 's32[1]{0}', space=sflag, size = 0x4, scoped, tag = 'scoped memory for tpu_custom_call.1']
    #allocation29 [shape = 'u8[512]{0}', space=vmem, size = 0x400, scoped, tag = 'input window, operand 16, single buffered']
    #allocation30 [shape = 'u8[512]{0}', space=vmem, size = 0x400, scoped, tag = 'input window, operand 17, single buffered']
    #allocation31 [shape = 's32[1]{0}', space=sflag, size = 0x4, scoped, tag = 'scoped memory for tpu_custom_call.1']
    #allocation32 [shape = 'u8[512]{0}', space=vmem, size = 0x400, scoped, tag = 'input window, operand 18, single buffered']
    #allocation33 [shape = 'u8[8192]{0}', space=vmem, size = 0x2000, scoped, tag = 'output window, operand 0, single buffered']
    #allocation34 [shape = 'u8[16384]{0}', space=vmem, size = 0x4000, scoped, tag = 'output window, operand 1, single buffered']
    #allocation35 [shape = 's32[1]{0}', space=sflag, size = 0x4, scoped, tag = 'scoped memory for tpu_custom_call.1']
    %26 = vsyncpa [#allocation4], 0
    %27 = vsyncpa [#allocation7], 0
    %28 = vsyncpa [#allocation10], 0
    %29 = vsyncpa [#allocation13], 0
    %30 = vsyncpa [#allocation16], 0
    %31 = vsyncpa [#allocation19], 0
    %32 = vsyncpa [#allocation22], 0
    %33 = vsyncpa [#allocation25], 0
    %34 = vsyncpa [#allocation28], 0
    %35 = vsyncpa [#allocation31], 0
    %36 = vsyncpa [#allocation5], 0
    %37 = vsyncpa [#allocation35], 0
    // Predicated region
    $region2: #{tpu_custom_call.1} parent=1 // pred_check
      _
    $region3: #{tpu_custom_call.1} parent=1 // pred_check_branch
      %39 = sbr.rel (0) target = $region5
    $region4: #{tpu_custom_call.1} parent=1 // pred_region
      %s41 = ssub.s32 256, 256
      %42 = vsyncadd [#allocation4], %s41
      %s43 = sshll.u32 [#allocation3], 4
      %s44 = int_to_ptr.vmem [resolvable:$true] %s43
      %49 = dma.hbm_to_vmem [thread:$0]  %s0, 256, %s44, [#allocation4], 128, 128, 8
    $region5: #{tpu_custom_call.1} parent=1 // pred_fallthru
      _
    // Predicated region
    $region6: #{tpu_custom_call.1} parent=1 // pred_check
      _
    $region7: #{tpu_custom_call.1} parent=1 // pred_check_branch
      %51 = sbr.rel (0) target = $region9
    $region8: #{tpu_custom_call.1} parent=1 // pred_region
      %s53 = ssub.s32 128, 128
      %54 = vsyncadd [#allocation7], %s53
      %s55 = sshll.u32 [#allocation6], 4
      %s56 = int_to_ptr.vmem [resolvable:$true] %s55
      %61 = dma.hbm_to_vmem [thread:$0]  %s1, 128, %s56, [#allocation7], 64, 64, 4
    $region9: #{tpu_custom_call.1} parent=1 // pred_fallthru
      _
    // Predicated region
    $region10: #{tpu_custom_call.1} parent=1 // pred_check
      _
    $region11: #{tpu_custom_call.1} parent=1 // pred_check_branch
      %63 = sbr.rel (0) target = $region13
    $region12: #{tpu_custom_call.1} parent=1 // pred_region
      %s65 = ssub.s32 256, 256
      %66 = vsyncadd [#allocation7], %s65
      %s67 = sshll.u32 [#allocation8], 4
      %s68 = int_to_ptr.vmem [resolvable:$true] %s67
      %73 = dma.hbm_to_vmem [thread:$0]  %s2, 256, %s68, [#allocation7], 128, 128, 8
    $region13: #{tpu_custom_call.1} parent=1 // pred_fallthru
      _
    // Predicated region
    $region14: #{tpu_custom_call.1} parent=1 // pred_check
      _
    $region15: #{tpu_custom_call.1} parent=1 // pred_check_branch
      %75 = sbr.rel (0) target = $region17
    $region16: #{tpu_custom_call.1} parent=1 // pred_region
      %s77 = ssub.s32 256, 256
      %78 = vsyncadd [#allocation10], %s77
      %s79 = sshll.u32 [#allocation9], 4
      %s80 = int_to_ptr.vmem [resolvable:$true] %s79
      %85 = dma.hbm_to_vmem [thread:$0]  %s3, 256, %s80, [#allocation10], 64, 64, 4
    $region17: #{tpu_custom_call.1} parent=1 // pred_fallthru
      _
    // Predicated region
    $region18: #{tpu_custom_call.1} parent=1 // pred_check
      _
    $region19: #{tpu_custom_call.1} parent=1 // pred_check_branch
      %87 = sbr.rel (0) target = $region21
    $region20: #{tpu_custom_call.1} parent=1 // pred_region
      %s89 = ssub.s32 16, 16
      %90 = vsyncadd [#allocation10], %s89
      %s92 = sshll.u32 [#allocation11], 4
      %s93 = int_to_ptr.vmem [resolvable:$true] %s92
      %95 = dma.hbm_to_vmem [thread:$0]  %s4, 16, %s93, [#allocation10]
    $region21: #{tpu_custom_call.1} parent=1 // pred_fallthru
      _
    // Predicated region
    $region22: #{tpu_custom_call.1} parent=1 // pred_check
      _
    $region23: #{tpu_custom_call.1} parent=1 // pred_check_branch
      %97 = sbr.rel (0) target = $region25
    $region24: #{tpu_custom_call.1} parent=1 // pred_region
      %s99 = ssub.s32 256, 256
      %100 = vsyncadd [#allocation13], %s99
      %s101 = sshll.u32 [#allocation12], 4
      %s102 = int_to_ptr.vmem [resolvable:$true] %s101
      %107 = dma.hbm_to_vmem [thread:$0]  %s5, 256, %s102, [#allocation13], 64, 64, 4
    $region25: #{tpu_custom_call.1} parent=1 // pred_fallthru
      _
    // Predicated region
    $region26: #{tpu_custom_call.1} parent=1 // pred_check
      _
    $region27: #{tpu_custom_call.1} parent=1 // pred_check_branch
      %109 = sbr.rel (0) target = $region29
    $region28: #{tpu_custom_call.1} parent=1 // pred_region
      %s111 = ssub.s32 16, 16
      %112 = vsyncadd [#allocation13], %s111
      %s114 = sshll.u32 [#allocation14], 4
      %s115 = int_to_ptr.vmem [resolvable:$true] %s114
      %117 = dma.hbm_to_vmem [thread:$0]  %s6, 16, %s115, [#allocation13]
    $region29: #{tpu_custom_call.1} parent=1 // pred_fallthru
      _
    // Predicated region
    $region30: #{tpu_custom_call.1} parent=1 // pred_check
      _
    $region31: #{tpu_custom_call.1} parent=1 // pred_check_branch
      %119 = sbr.rel (0) target = $region33
    $region32: #{tpu_custom_call.1} parent=1 // pred_region
      %s121 = ssub.s32 256, 256
      %122 = vsyncadd [#allocation16], %s121
      %s123 = sshll.u32 [#allocation15], 4
      %s124 = int_to_ptr.vmem [resolvable:$true] %s123
      %129 = dma.hbm_to_vmem [thread:$0]  %s7, 256, %s124, [#allocation16], 64, 64, 4
    $region33: #{tpu_custom_call.1} parent=1 // pred_fallthru
      _
    // Predicated region
    $region34: #{tpu_custom_call.1} parent=1 // pred_check
      _
    $region35: #{tpu_custom_call.1} parent=1 // pred_check_branch
      %131 = sbr.rel (0) target = $region37
    $region36: #{tpu_custom_call.1} parent=1 // pred_region
      %s133 = ssub.s32 16, 16
      %134 = vsyncadd [#allocation16], %s133
      %s136 = sshll.u32 [#allocation17], 4
      %s137 = int_to_ptr.vmem [resolvable:$true] %s136
      %139 = dma.hbm_to_vmem [thread:$0]  %s8, 16, %s137, [#allocation16]
    $region37: #{tpu_custom_call.1} parent=1 // pred_fallthru
      _
    // Predicated region
    $region38: #{tpu_custom_call.1} parent=1 // pred_check
      _
    $region39: #{tpu_custom_call.1} parent=1 // pred_check_branch
      %141 = sbr.rel (0) target = $region41
    $region40: #{tpu_custom_call.1} parent=1 // pred_region
      %s143 = ssub.s32 256, 256
      %144 = vsyncadd [#allocation19], %s143
      %s145 = sshll.u32 [#allocation18], 4
      %s146 = int_to_ptr.vmem [resolvable:$true] %s145
      %151 = dma.hbm_to_vmem [thread:$0]  %s9, 256, %s146, [#allocation19], 64, 64, 4
    $region41: #{tpu_custom_call.1} parent=1 // pred_fallthru
      _
    // Predicated region
    $region42: #{tpu_custom_call.1} parent=1 // pred_check
      _
    $region43: #{tpu_custom_call.1} parent=1 // pred_check_branch
      %153 = sbr.rel (0) target = $region45
    $region44: #{tpu_custom_call.1} parent=1 // pred_region
      %s155 = ssub.s32 16, 16
      %156 = vsyncadd [#allocation19], %s155
      %s158 = sshll.u32 [#allocation20], 4
      %s159 = int_to_ptr.vmem [resolvable:$true] %s158
      %161 = dma.hbm_to_vmem [thread:$0]  %s10, 16, %s159, [#allocation19]
    $region45: #{tpu_custom_call.1} parent=1 // pred_fallthru
      _
    // Predicated region
    $region46: #{tpu_custom_call.1} parent=1 // pred_check
      _
    $region47: #{tpu_custom_call.1} parent=1 // pred_check_branch
      %163 = sbr.rel (0) target = $region49
    $region48: #{tpu_custom_call.1} parent=1 // pred_region
      %s165 = ssub.s32 16, 16
      %166 = vsyncadd [#allocation22], %s165
      %s168 = sshll.u32 [#allocation21], 4
      %s169 = int_to_ptr.vmem [resolvable:$true] %s168
      %171 = dma.hbm_to_vmem [thread:$0]  %s11, 16, %s169, [#allocation22]
    $region49: #{tpu_custom_call.1} parent=1 // pred_fallthru
      _
    // Predicated region
    $region50: #{tpu_custom_call.1} parent=1 // pred_check
      _
    $region51: #{tpu_custom_call.1} parent=1 // pred_check_branch
      %173 = sbr.rel (0) target = $region53
    $region52: #{tpu_custom_call.1} parent=1 // pred_region
      %s175 = ssub.s32 16, 16
      %176 = vsyncadd [#allocation22], %s175
      %s178 = sshll.u32 [#allocation23], 4
      %s179 = int_to_ptr.vmem [resolvable:$true] %s178
      %181 = dma.hbm_to_vmem [thread:$0]  %s12, 16, %s179, [#allocation22]
    $region53: #{tpu_custom_call.1} parent=1 // pred_fallthru
      _
    // Predicated region
    $region54: #{tpu_custom_call.1} parent=1 // pred_check
      _
    $region55: #{tpu_custom_call.1} parent=1 // pred_check_branch
      %183 = sbr.rel (0) target = $region57
    $region56: #{tpu_custom_call.1} parent=1 // pred_region
      %s185 = ssub.s32 256, 256
      %186 = vsyncadd [#allocation25], %s185
      %s187 = sshll.u32 [#allocation24], 4
      %s188 = int_to_ptr.vmem [resolvable:$true] %s187
      %193 = dma.hbm_to_vmem [thread:$0]  %s13, 256, %s188, [#allocation25], 64, 64, 4
    $region57: #{tpu_custom_call.1} parent=1 // pred_fallthru
      _
    // Predicated region
    $region58: #{tpu_custom_call.1} parent=1 // pred_check
      _
    $region59: #{tpu_custom_call.1} parent=1 // pred_check_branch
      %195 = sbr.rel (0) target = $region61
    $region60: #{tpu_custom_call.1} parent=1 // pred_region
      %s197 = ssub.s32 16, 16
      %198 = vsyncadd [#allocation25], %s197
      %s200 = sshll.u32 [#allocation26], 4
      %s201 = int_to_ptr.vmem [resolvable:$true] %s200
      %203 = dma.hbm_to_vmem [thread:$0]  %s14, 16, %s201, [#allocation25]
    $region61: #{tpu_custom_call.1} parent=1 // pred_fallthru
      _
    // Predicated region
    $region62: #{tpu_custom_call.1} parent=1 // pred_check
      _
    $region63: #{tpu_custom_call.1} parent=1 // pred_check_branch
      %205 = sbr.rel (0) target = $region65
    $region64: #{tpu_custom_call.1} parent=1 // pred_region
      %s207 = ssub.s32 512, 512
      %208 = vsyncadd [#allocation28], %s207
      %s209 = sshll.u32 [#allocation27], 4
      %s210 = int_to_ptr.vmem [resolvable:$true] %s209
      %215 = dma.hbm_to_vmem [thread:$0]  %s15, 512, %s210, [#allocation28], 64, 64, 4
    $region65: #{tpu_custom_call.1} parent=1 // pred_fallthru
      _
    // Predicated region
    $region66: #{tpu_custom_call.1} parent=1 // pred_check
      _
    $region67: #{tpu_custom_call.1} parent=1 // pred_check_branch
      %217 = sbr.rel (0) target = $region69
    $region68: #{tpu_custom_call.1} parent=1 // pred_region
      %s219 = ssub.s32 16, 16
      %220 = vsyncadd [#allocation28], %s219
      %s222 = sshll.u32 [#allocation29], 4
      %s223 = int_to_ptr.vmem [resolvable:$true] %s222
      %225 = dma.hbm_to_vmem [thread:$0]  %s16, 16, %s223, [#allocation28]
    $region69: #{tpu_custom_call.1} parent=1 // pred_fallthru
      _
    // Predicated region
    $region70: #{tpu_custom_call.1} parent=1 // pred_check
      _
    $region71: #{tpu_custom_call.1} parent=1 // pred_check_branch
      %227 = sbr.rel (0) target = $region73
    $region72: #{tpu_custom_call.1} parent=1 // pred_region
      %s229 = ssub.s32 16, 16
      %230 = vsyncadd [#allocation31], %s229
      %s232 = sshll.u32 [#allocation30], 4
      %s233 = int_to_ptr.vmem [resolvable:$true] %s232
      %235 = dma.hbm_to_vmem [thread:$0]  %s17, 16, %s233, [#allocation31]
    $region73: #{tpu_custom_call.1} parent=1 // pred_fallthru
      _
    // Predicated region
    $region74: #{tpu_custom_call.1} parent=1 // pred_check
      _
    $region75: #{tpu_custom_call.1} parent=1 // pred_check_branch
      %237 = sbr.rel (0) target = $region77
    $region76: #{tpu_custom_call.1} parent=1 // pred_region
      %s239 = ssub.s32 16, 16
      %240 = vsyncadd [#allocation31], %s239
      %s242 = sshll.u32 [#allocation32], 4
      %s243 = int_to_ptr.vmem [resolvable:$true] %s242
      %245 = dma.hbm_to_vmem [thread:$0]  %s18, 16, %s243, [#allocation31]
    $region77: #{tpu_custom_call.1} parent=1 // pred_fallthru
      _
    // Predicated region
    $region78: #{tpu_custom_call.1} parent=1 // pred_check
      _
    $region79: #{tpu_custom_call.1} parent=1 // pred_check_branch
      %247 = sbr.rel (0) target = $region81
    $region80: #{tpu_custom_call.1} parent=1 // pred_region
      %248 = dma.done [#allocation4], 256
    $region81: #{tpu_custom_call.1} parent=1 // pred_fallthru
      _
    // Predicated region
    $region82: #{tpu_custom_call.1} parent=1 // pred_check
      _
    $region83: #{tpu_custom_call.1} parent=1 // pred_check_branch
      %250 = sbr.rel (0) target = $region85
    $region84: #{tpu_custom_call.1} parent=1 // pred_region
      %251 = dma.done [#allocation7], 128
    $region85: #{tpu_custom_call.1} parent=1 // pred_fallthru
      _
    // Predicated region
    $region86: #{tpu_custom_call.1} parent=1 // pred_check
      _
    $region87: #{tpu_custom_call.1} parent=1 // pred_check_branch
      %253 = sbr.rel (0) target = $region89
    $region88: #{tpu_custom_call.1} parent=1 // pred_region
      %254 = dma.done [#allocation7], 256
    $region89: #{tpu_custom_call.1} parent=1 // pred_fallthru
      _
    // Predicated region
    $region90: #{tpu_custom_call.1} parent=1 // pred_check
      _
    $region91: #{tpu_custom_call.1} parent=1 // pred_check_branch
      %256 = sbr.rel (0) target = $region93
    $region92: #{tpu_custom_call.1} parent=1 // pred_region
      %257 = dma.done [#allocation10], 256
    $region93: #{tpu_custom_call.1} parent=1 // pred_fallthru
      _
    // Predicated region
    $region94: #{tpu_custom_call.1} parent=1 // pred_check
      _
    $region95: #{tpu_custom_call.1} parent=1 // pred_check_branch
      %259 = sbr.rel (0) target = $region97
    $region96: #{tpu_custom_call.1} parent=1 // pred_region
      %260 = dma.done [#allocation10], 16
    $region97: #{tpu_custom_call.1} parent=1 // pred_fallthru
      _
    // Predicated region
    $region98: #{tpu_custom_call.1} parent=1 // pred_check
      _
    $region99: #{tpu_custom_call.1} parent=1 // pred_check_branch
      %262 = sbr.rel (0) target = $region101
    $region100: #{tpu_custom_call.1} parent=1 // pred_region
      %263 = dma.done [#allocation13], 256
    $region101: #{tpu_custom_call.1} parent=1 // pred_fallthru
      _
    // Predicated region
    $region102: #{tpu_custom_call.1} parent=1 // pred_check
      _
    $region103: #{tpu_custom_call.1} parent=1 // pred_check_branch
      %265 = sbr.rel (0) target = $region105
    $region104: #{tpu_custom_call.1} parent=1 // pred_region
      %266 = dma.done [#allocation13], 16
    $region105: #{tpu_custom_call.1} parent=1 // pred_fallthru
      _
    // Predicated region
    $region106: #{tpu_custom_call.1} parent=1 // pred_check
      _
    $region107: #{tpu_custom_call.1} parent=1 // pred_check_branch
      %268 = sbr.rel (0) target = $region109
    $region108: #{tpu_custom_call.1} parent=1 // pred_region
      %269 = dma.done [#allocation16], 256
    $region109: #{tpu_custom_call.1} parent=1 // pred_fallthru
      _
    // Predicated region
    $region110: #{tpu_custom_call.1} parent=1 // pred_check
      _
    $region111: #{tpu_custom_call.1} parent=1 // pred_check_branch
      %271 = sbr.rel (0) target = $region113
    $region112: #{tpu_custom_call.1} parent=1 // pred_region
      %272 = dma.done [#allocation16], 16
    $region113: #{tpu_custom_call.1} parent=1 // pred_fallthru
      _
    // Predicated region
    $region114: #{tpu_custom_call.1} parent=1 // pred_check
      _
    $region115: #{tpu_custom_call.1} parent=1 // pred_check_branch
      %274 = sbr.rel (0) target = $region117
    $region116: #{tpu_custom_call.1} parent=1 // pred_region
      %275 = dma.done [#allocation19], 256
    $region117: #{tpu_custom_call.1} parent=1 // pred_fallthru
      _
    // Predicated region
    $region118: #{tpu_custom_call.1} parent=1 // pred_check
      _
    $region119: #{tpu_custom_call.1} parent=1 // pred_check_branch
      %277 = sbr.rel (0) target = $region121
    $region120: #{tpu_custom_call.1} parent=1 // pred_region
      %278 = dma.done [#allocation19], 16
    $region121: #{tpu_custom_call.1} parent=1 // pred_fallthru
      _
    // Predicated region
    $region122: #{tpu_custom_call.1} parent=1 // pred_check
      _
    $region123: #{tpu_custom_call.1} parent=1 // pred_check_branch
      %280 = sbr.rel (0) target = $region125
    $region124: #{tpu_custom_call.1} parent=1 // pred_region
      %281 = dma.done [#allocation22], 16
    $region125: #{tpu_custom_call.1} parent=1 // pred_fallthru
      _
    // Predicated region
    $region126: #{tpu_custom_call.1} parent=1 // pred_check
      _
    $region127: #{tpu_custom_call.1} parent=1 // pred_check_branch
      %283 = sbr.rel (0) target = $region129
    $region128: #{tpu_custom_call.1} parent=1 // pred_region
      %284 = dma.done [#allocation22], 16
    $region129: #{tpu_custom_call.1} parent=1 // pred_fallthru
      _
    // Predicated region
    $region130: #{tpu_custom_call.1} parent=1 // pred_check
      _
    $region131: #{tpu_custom_call.1} parent=1 // pred_check_branch
      %286 = sbr.rel (0) target = $region133
    $region132: #{tpu_custom_call.1} parent=1 // pred_region
      %287 = dma.done [#allocation25], 256
    $region133: #{tpu_custom_call.1} parent=1 // pred_fallthru
      _
    // Predicated region
    $region134: #{tpu_custom_call.1} parent=1 // pred_check
      _
    $region135: #{tpu_custom_call.1} parent=1 // pred_check_branch
      %289 = sbr.rel (0) target = $region137
    $region136: #{tpu_custom_call.1} parent=1 // pred_region
      %290 = dma.done [#allocation25], 16
    $region137: #{tpu_custom_call.1} parent=1 // pred_fallthru
      _
    // Predicated region
    $region138: #{tpu_custom_call.1} parent=1 // pred_check
      _
    $region139: #{tpu_custom_call.1} parent=1 // pred_check_branch
      %292 = sbr.rel (0) target = $region141
    $region140: #{tpu_custom_call.1} parent=1 // pred_region
      %293 = dma.done [#allocation28], 512
    $region141: #{tpu_custom_call.1} parent=1 // pred_fallthru
      _
    // Predicated region
    $region142: #{tpu_custom_call.1} parent=1 // pred_check
      _
    $region143: #{tpu_custom_call.1} parent=1 // pred_check_branch
      %295 = sbr.rel (0) target = $region145
    $region144: #{tpu_custom_call.1} parent=1 // pred_region
      %296 = dma.done [#allocation28], 16
    $region145: #{tpu_custom_call.1} parent=1 // pred_fallthru
      _
    // Predicated region
    $region146: #{tpu_custom_call.1} parent=1 // pred_check
      _
    $region147: #{tpu_custom_call.1} parent=1 // pred_check_branch
      %298 = sbr.rel (0) target = $region149
    $region148: #{tpu_custom_call.1} parent=1 // pred_region
      %299 = dma.done [#allocation31], 16
    $region149: #{tpu_custom_call.1} parent=1 // pred_fallthru
      _
    // Predicated region
    $region150: #{tpu_custom_call.1} parent=1 // pred_check
      _
    $region151: #{tpu_custom_call.1} parent=1 // pred_check_branch
      %301 = sbr.rel (0) target = $region153
    $region152: #{tpu_custom_call.1} parent=1 // pred_region
      %302 = dma.done [#allocation31], 16
    $region153: #{tpu_custom_call.1} parent=1 // pred_fallthru
      _
    %v304 = vld [vmem:[#allocation3] sm:$0xff]
    %v305 = vld [vmem:[#allocation3 + $0x8] sm:$0xff]
    %v306 = vld [vmem:[#allocation8] sm:$0xff]
    %v307 = vld [vmem:[#allocation8 + $0x8] sm:$0xff]
    %v308 = vpack.c.bf16 %v305, %v304
    %v309 = vld [vmem:[#allocation9] sm:$0xf]
    %v310 = vld [vmem:[#allocation9 + $0x4] sm:$0xf]
    %v311 = vld [vmem:[#allocation9 + $0x8] sm:$0xf]
    %v312 = vld [vmem:[#allocation9 + $0xc] sm:$0xf]
    %v313 = vld [vmem:[#allocation11] sm:$0x1]
    %v315 = vlaneseq
    %v316 = vshrl.u32 %v315, 7
    %v317 = vsub.s32 0, %v316
    %v318 = vrot.slane %v313, %v317
    %v324 = vunpack.c.l.b16 %v309
    %v325 = vunpack.c.l.b16 %v310
    %v326 = vunpack.c.l.b16 %v311
    %v327 = vunpack.c.l.b16 %v312
    %v328 = vpack.c.b16 %v325, %v324
    %v329 = vpack.c.b16 %v327, %v326
    %vm332 = vcmask 261120
    %v334 = vsel %vm332, %v308, 0
    %336 = vmatprep.subr.bf16.mxu0 0
    %337 = vmatpush1.bf16.msra.mxu0 %v328
    %338 = vmatprep.subr.bf16.mxu0 0
    %339 = vmatpush1.bf16.msra.mxu0 %v329
    %340 = vmatprep.subr.bf16.mxu0 0
    %341 = vmatpush1.bf16.msra.mxu0 0
    %342 = vmatprep.subr.bf16.mxu0 0
    %343 = vmatpush1.bf16.msra.mxu0 0
    %344 = vmatprep.subr.bf16.mxu0 0
    %345 = vmatpush1.bf16.msra.mxu0 0
    %346 = vmatprep.subr.bf16.mxu0 0
    %347 = vmatpush1.bf16.msra.mxu0 0
    %348 = vmatprep.subr.bf16.mxu0 0
    %349 = vmatpush1.bf16.msra.mxu0 0
    %350 = vmatprep.subr.bf16.mxu0 0
    %351 = vmatpush1.bf16.msra.mxu0 0
    %352 = vmatprep.subr.bf16.mxu0 0
    %353 = vmatpush1.bf16.msra.mxu0 0
    %354 = vmatprep.subr.bf16.mxu0 0
    %355 = vmatpush1.bf16.msra.mxu0 0
    %356 = vmatprep.subr.bf16.mxu0 0
    %357 = vmatpush1.bf16.msra.mxu0 0
    %358 = vmatprep.subr.bf16.mxu0 0
    %359 = vmatpush1.bf16.msra.mxu0 0
    %360 = vmatprep.subr.bf16.mxu0 0
    %361 = vmatpush1.bf16.msra.mxu0 0
    %362 = vmatprep.subr.bf16.mxu0 0
    %363 = vmatpush1.bf16.msra.mxu0 0
    %364 = vmatprep.subr.bf16.mxu0 0
    %365 = vmatpush1.bf16.msra.mxu0 0
    %366 = vmatprep.subr.bf16.mxu0 0
    %367 = vmatpush1.bf16.msra.mxu0 0
    %368 = vmatprep.mubr.bf16.mxu0 0
    %369 = vmatmul.mubr.bf16.gmra.mrb[0].mxu0 %v334
    %v370 = vpop.f32.mrb[0].mxu0
    %v371 = vadd.f32 %v318, %v370
    %v372 = vpop.f32.mrb[0].mxu0
    %v373 = vpop.f32.mrb[0].mxu0
    %v374 = vadd.f32 %v318, %v373
    %v375 = vpop.f32.mrb[0].mxu0
    %376 = vdwg.mxu0
    %v377 = vld [vmem:[#allocation12] sm:$0xf]
    %v378 = vld [vmem:[#allocation12 + $0x4] sm:$0xf]
    %v379 = vld [vmem:[#allocation12 + $0x8] sm:$0xf]
    %v380 = vld [vmem:[#allocation12 + $0xc] sm:$0xf]
    %v381 = vld [vmem:[#allocation14] sm:$0x1]
    %v383 = vlaneseq
    %v384 = vshrl.u32 %v383, 7
    %v385 = vsub.s32 0, %v384
    %v386 = vrot.slane %v381, %v385
    %v392 = vunpack.c.l.b16 %v377
    %v393 = vunpack.c.l.b16 %v378
    %v394 = vunpack.c.l.b16 %v379
    %v395 = vunpack.c.l.b16 %v380
    %v396 = vpack.c.b16 %v393, %v392
    %v397 = vpack.c.b16 %v395, %v394
    %400 = vmatprep.subr.bf16.mxu0 0
    %401 = vmatpush1.bf16.msra.mxu0 %v396
    %402 = vmatprep.subr.bf16.mxu0 0
    %403 = vmatpush1.bf16.msra.mxu0 %v397
    %404 = vmatprep.subr.bf16.mxu0 0
    %405 = vmatpush1.bf16.msra.mxu0 0
    %406 = vmatprep.subr.bf16.mxu0 0
    %407 = vmatpush1.bf16.msra.mxu0 0
    %408 = vmatprep.subr.bf16.mxu0 0
    %409 = vmatpush1.bf16.msra.mxu0 0
    %410 = vmatprep.subr.bf16.mxu0 0
    %411 = vmatpush1.bf16.msra.mxu0 0
    %412 = vmatprep.subr.bf16.mxu0 0
    %413 = vmatpush1.bf16.msra.mxu0 0
    %414 = vmatprep.subr.bf16.mxu0 0
    %415 = vmatpush1.bf16.msra.mxu0 0
    %416 = vmatprep.subr.bf16.mxu0 0
    %417 = vmatpush1.bf16.msra.mxu0 0
    %418 = vmatprep.subr.bf16.mxu0 0
    %419 = vmatpush1.bf16.msra.mxu0 0
    %420 = vmatprep.subr.bf16.mxu0 0
    %421 = vmatpush1.bf16.msra.mxu0 0
    %422 = vmatprep.subr.bf16.mxu0 0
    %423 = vmatpush1.bf16.msra.mxu0 0
    %424 = vmatprep.subr.bf16.mxu0 0
    %425 = vmatpush1.bf16.msra.mxu0 0
    %426 = vmatprep.subr.bf16.mxu0 0
    %427 = vmatpush1.bf16.msra.mxu0 0
    %428 = vmatprep.subr.bf16.mxu0 0
    %429 = vmatpush1.bf16.msra.mxu0 0
    %430 = vmatprep.subr.bf16.mxu0 0
    %431 = vmatpush1.bf16.msra.mxu0 0
    %432 = vmatprep.mubr.bf16.mxu0 0
    %433 = vmatmul.mubr.bf16.gmra.mrb[0].mxu0 %v334
    %v434 = vpop.f32.mrb[0].mxu0
    %v435 = vadd.f32 %v386, %v434
    %v436 = vpop.f32.mrb[0].mxu0
    %v437 = vpop.f32.mrb[0].mxu0
    %v438 = vadd.f32 %v386, %v437
    %v439 = vpop.f32.mrb[0].mxu0
    %440 = vdwg.mxu0
    %v441 = vld [vmem:[#allocation15] sm:$0xf]
    %v442 = vld [vmem:[#allocation15 + $0x4] sm:$0xf]
    %v443 = vld [vmem:[#allocation15 + $0x8] sm:$0xf]
    %v444 = vld [vmem:[#allocation15 + $0xc] sm:$0xf]
    %v445 = vld [vmem:[#allocation17] sm:$0x1]
    %v447 = vlaneseq
    %v448 = vshrl.u32 %v447, 7
    %v449 = vsub.s32 0, %v448
    %v450 = vrot.slane %v445, %v449
    %v456 = vunpack.c.l.b16 %v441
    %v457 = vunpack.c.l.b16 %v442
    %v458 = vunpack.c.l.b16 %v443
    %v459 = vunpack.c.l.b16 %v444
    %v460 = vpack.c.b16 %v457, %v456
    %v461 = vpack.c.b16 %v459, %v458
    %464 = vmatprep.subr.bf16.mxu0 0
    %465 = vmatpush1.bf16.msra.mxu0 %v460
    %466 = vmatprep.subr.bf16.mxu0 0
    %467 = vmatpush1.bf16.msra.mxu0 %v461
    %468 = vmatprep.subr.bf16.mxu0 0
    %469 = vmatpush1.bf16.msra.mxu0 0
    %470 = vmatprep.subr.bf16.mxu0 0
    %471 = vmatpush1.bf16.msra.mxu0 0
    %472 = vmatprep.subr.bf16.mxu0 0
    %473 = vmatpush1.bf16.msra.mxu0 0
    %474 = vmatprep.subr.bf16.mxu0 0
    %475 = vmatpush1.bf16.msra.mxu0 0
    %476 = vmatprep.subr.bf16.mxu0 0
    %477 = vmatpush1.bf16.msra.mxu0 0
    %478 = vmatprep.subr.bf16.mxu0 0
    %479 = vmatpush1.bf16.msra.mxu0 0
    %480 = vmatprep.subr.bf16.mxu0 0
    %481 = vmatpush1.bf16.msra.mxu0 0
    %482 = vmatprep.subr.bf16.mxu0 0
    %483 = vmatpush1.bf16.msra.mxu0 0
    %484 = vmatprep.subr.bf16.mxu0 0
    %485 = vmatpush1.bf16.msra.mxu0 0
    %486 = vmatprep.subr.bf16.mxu0 0
    %487 = vmatpush1.bf16.msra.mxu0 0
    %488 = vmatprep.subr.bf16.mxu0 0
    %489 = vmatpush1.bf16.msra.mxu0 0
    %490 = vmatprep.subr.bf16.mxu0 0
    %491 = vmatpush1.bf16.msra.mxu0 0
    %492 = vmatprep.subr.bf16.mxu0 0
    %493 = vmatpush1.bf16.msra.mxu0 0
    %494 = vmatprep.subr.bf16.mxu0 0
    %495 = vmatpush1.bf16.msra.mxu0 0
    %496 = vmatprep.mubr.bf16.mxu0 0
    %497 = vmatmul.mubr.bf16.gmra.mrb[0].mxu0 %v334
    %v498 = vpop.f32.mrb[0].mxu0
    %v499 = vadd.f32 %v450, %v498
    %v500 = vpop.f32.mrb[0].mxu0
    %v501 = vpop.f32.mrb[0].mxu0
    %v502 = vadd.f32 %v450, %v501
    %v503 = vpop.f32.mrb[0].mxu0
    %504 = vdwg.mxu0
    %v505 = vld [vmem:[#allocation6] sm:$0xf]
    %v506 = vld [vmem:[#allocation6 + $0x4] sm:$0xf]
    %v507 = vunpack.c.l.bf16 %v505
    %v508 = vunpack.c.l.bf16 %v506
    %v509 = vpack.c.bf16 %v371, %v371
    %v510 = vpack.c.bf16 %v374, %v374
    %v511 = vpack.c.bf16 %v435, %v435
    %v512 = vpack.c.bf16 %v438, %v438
    %v513 = vpack.c.bf16 %v499, %v499
    %v514 = vpack.c.bf16 %v502, %v502
    %vm515 = vcmask 130048
    %v517 = vsel %vm515, %v509, 0
    %v520 = vsel %vm515, %v511, 0
    %522 = vmatprep.subr.bf16.mxu0 0
    %523 = vmatpush1.bf16.xpose.msra.mxu0 %v520
    %524 = vmatprep.subr.bf16.mxu0 0
    %525 = vmatpush1.bf16.xpose.msra.mxu0 0
    %526 = vmatprep.subr.bf16.mxu0 0
    %527 = vmatpush1.bf16.xpose.msra.mxu0 0
    %528 = vmatprep.subr.bf16.mxu0 0
    %529 = vmatpush1.bf16.xpose.msra.mxu0 0
    %530 = vmatprep.subr.bf16.mxu0 0
    %531 = vmatpush1.bf16.xpose.msra.mxu0 0
    %532 = vmatprep.subr.bf16.mxu0 0
    %533 = vmatpush1.bf16.xpose.msra.mxu0 0
    %534 = vmatprep.subr.bf16.mxu0 0
    %535 = vmatpush1.bf16.xpose.msra.mxu0 0
    %536 = vmatprep.subr.bf16.mxu0 0
    %537 = vmatpush1.bf16.xpose.msra.mxu0 0
    %538 = vmatprep.subr.bf16.mxu0 0
    %539 = vmatpush1.bf16.xpose.msra.mxu0 0
    %540 = vmatprep.subr.bf16.mxu0 0
    %541 = vmatpush1.bf16.xpose.msra.mxu0 0
    %542 = vmatprep.subr.bf16.mxu0 0
    %543 = vmatpush1.bf16.xpose.msra.mxu0 0
    %544 = vmatprep.subr.bf16.mxu0 0
    %545 = vmatpush1.bf16.xpose.msra.mxu0 0
    %546 = vmatprep.subr.bf16.mxu0 0
    %547 = vmatpush1.bf16.xpose.msra.mxu0 0
    %548 = vmatprep.subr.bf16.mxu0 0
    %549 = vmatpush1.bf16.xpose.msra.mxu0 0
    %550 = vmatprep.subr.bf16.mxu0 0
    %551 = vmatpush1.bf16.xpose.msra.mxu0 0
    %552 = vmatprep.subr.bf16.mxu0 0
    %553 = vmatpush1.bf16.xpose.msra.mxu0 0
    %554 = vmatprep.mubr.bf16.mxu0 0
    %555 = vmatmul.mubr.bf16.gmra.mrb[0].mxu0 %v517
    %v556 = vpop.f32.mrb[0].mxu0
    %v557 = vadd.f32 0.0, %v556
    %v558 = vpop.f32.mrb[0].mxu0
    %v559 = vpop.f32.mrb[0].mxu0
    %v560 = vpop.f32.mrb[0].mxu0
    %561 = vdwg.mxu0
    %v563 = vsel %vm515, %v510, 0
    %v566 = vsel %vm515, %v512, 0
    %568 = vmatprep.subr.bf16.mxu0 0
    %569 = vmatpush1.bf16.xpose.msra.mxu0 %v566
    %570 = vmatprep.subr.bf16.mxu0 0
    %571 = vmatpush1.bf16.xpose.msra.mxu0 0
    %572 = vmatprep.subr.bf16.mxu0 0
    %573 = vmatpush1.bf16.xpose.msra.mxu0 0
    %574 = vmatprep.subr.bf16.mxu0 0
    %575 = vmatpush1.bf16.xpose.msra.mxu0 0
    %576 = vmatprep.subr.bf16.mxu0 0
    %577 = vmatpush1.bf16.xpose.msra.mxu0 0
    %578 = vmatprep.subr.bf16.mxu0 0
    %579 = vmatpush1.bf16.xpose.msra.mxu0 0
    %580 = vmatprep.subr.bf16.mxu0 0
    %581 = vmatpush1.bf16.xpose.msra.mxu0 0
    %582 = vmatprep.subr.bf16.mxu0 0
    %583 = vmatpush1.bf16.xpose.msra.mxu0 0
    %584 = vmatprep.subr.bf16.mxu0 0
    %585 = vmatpush1.bf16.xpose.msra.mxu0 0
    %586 = vmatprep.subr.bf16.mxu0 0
    %587 = vmatpush1.bf16.xpose.msra.mxu0 0
    %588 = vmatprep.subr.bf16.mxu0 0
    %589 = vmatpush1.bf16.xpose.msra.mxu0 0
    %590 = vmatprep.subr.bf16.mxu0 0
    %591 = vmatpush1.bf16.xpose.msra.mxu0 0
    %592 = vmatprep.subr.bf16.mxu0 0
    %593 = vmatpush1.bf16.xpose.msra.mxu0 0
    %594 = vmatprep.subr.bf16.mxu0 0
    %595 = vmatpush1.bf16.xpose.msra.mxu0 0
    %596 = vmatprep.subr.bf16.mxu0 0
    %597 = vmatpush1.bf16.xpose.msra.mxu0 0
    %598 = vmatprep.subr.bf16.mxu0 0
    %599 = vmatpush1.bf16.xpose.msra.mxu0 0
    %600 = vmatprep.mubr.bf16.mxu0 0
    %601 = vmatmul.mubr.bf16.gmra.mrb[0].mxu0 %v563
    %v602 = vpop.f32.mrb[0].mxu0
    %v603 = vadd.f32 0.0, %v602
    %v604 = vpop.f32.mrb[0].mxu0
    %v605 = vpop.f32.mrb[0].mxu0
    %v606 = vpop.f32.mrb[0].mxu0
    %607 = vdwg.mxu0
    %v608 = vmul.f32 %v557, 0.25
    %v609 = vmul.f32 %v603, 0.25
    %v610 = vadd.f32 %v608, %v507
    %v611 = vadd.f32 %v609, %v508
    %vm612 = vcmask 64512
    %v613 = vsel %vm612, %v610, -inf
    %614 = vmax.xlane.f32.xlu0 %v613
    %v615 = vpop.xlane.xlu0 %614
    %v616 = vsel %vm612, %v611, -inf
    %617 = vmax.xlane.f32.xlu0 %v616
    %v618 = vpop.xlane.xlu0 %617
    %v619 = vsub.f32 %v610, %v615
    %v620 = vsub.f32 %v611, %v618
    %v621 = vmul.f32 %v619, 1.442695
    %v622 = vpow.pop %v621
    %v623 = vmul.f32 %v620, 1.442695
    %v624 = vpow.pop %v623
    %v625 = vsel %vm612, %v622, 0.0
    %626 = vadd.xlane.f32.xlu0 %v625
    %v627 = vpop.xlane.xlu0 %626
    %v628 = vsel %vm612, %v624, 0.0
    %629 = vadd.xlane.f32.xlu0 %v628
    %v630 = vpop.xlane.xlu0 %629
    %v631 = vrcp.pop %v627
    %v632 = vrcp.pop %v630
    %v633 = vmul.f32 %v622, %v631
    %v634 = vmul.f32 %v624, %v632
    %635 = vst.msk [vmem:[#allocation34] sm:$0xff] %vm612, %v633
    %636 = vst.msk [vmem:[#allocation34 + $0x8] sm:$0xff] %vm612, %v634
    %v637 = vpack.c.bf16 %v633, %v633
    %v638 = vpack.c.bf16 %v634, %v634
    %v640 = vsel %vm612, %v637, 0
    %vm642 = vcmask 1043456
    %v644 = vsel %vm642, %v513, 0
    %646 = vmatprep.subr.bf16.mxu0 0
    %647 = vmatpush1.bf16.msra.mxu0 %v644
    %648 = vmatprep.subr.bf16.mxu0 0
    %649 = vmatpush1.bf16.msra.mxu0 0
    %650 = vmatprep.subr.bf16.mxu0 0
    %651 = vmatpush1.bf16.msra.mxu0 0
    %652 = vmatprep.subr.bf16.mxu0 0
    %653 = vmatpush1.bf16.msra.mxu0 0
    %654 = vmatprep.subr.bf16.mxu0 0
    %655 = vmatpush1.bf16.msra.mxu0 0
    %656 = vmatprep.subr.bf16.mxu0 0
    %657 = vmatpush1.bf16.msra.mxu0 0
    %658 = vmatprep.subr.bf16.mxu0 0
    %659 = vmatpush1.bf16.msra.mxu0 0
    %660 = vmatprep.subr.bf16.mxu0 0
    %661 = vmatpush1.bf16.msra.mxu0 0
    %662 = vmatprep.subr.bf16.mxu0 0
    %663 = vmatpush1.bf16.msra.mxu0 0
    %664 = vmatprep.subr.bf16.mxu0 0
    %665 = vmatpush1.bf16.msra.mxu0 0
    %666 = vmatprep.subr.bf16.mxu0 0
    %667 = vmatpush1.bf16.msra.mxu0 0
    %668 = vmatprep.subr.bf16.mxu0 0
    %669 = vmatpush1.bf16.msra.mxu0 0
    %670 = vmatprep.subr.bf16.mxu0 0
    %671 = vmatpush1.bf16.msra.mxu0 0
    %672 = vmatprep.subr.bf16.mxu0 0
    %673 = vmatpush1.bf16.msra.mxu0 0
    %674 = vmatprep.subr.bf16.mxu0 0
    %675 = vmatpush1.bf16.msra.mxu0 0
    %676 = vmatprep.subr.bf16.mxu0 0
    %677 = vmatpush1.bf16.msra.mxu0 0
    %678 = vmatprep.mubr.bf16.mxu0 0
    %679 = vmatmul.mubr.bf16.gmra.mrb[0].mxu0 %v640
    %v680 = vpop.f32.mrb[0].mxu0
    %v681 = vadd.f32 0.0, %v680
    %v682 = vpop.f32.mrb[0].mxu0
    %v683 = vpop.f32.mrb[0].mxu0
    %v684 = vpop.f32.mrb[0].mxu0
    %685 = vdwg.mxu0
    %v687 = vsel %vm612, %v638, 0
    %v690 = vsel %vm642, %v514, 0
    %692 = vmatprep.subr.bf16.mxu0 0
    %693 = vmatpush1.bf16.msra.mxu0 %v690
    %694 = vmatprep.subr.bf16.mxu0 0
    %695 = vmatpush1.bf16.msra.mxu0 0
    %696 = vmatprep.subr.bf16.mxu0 0
    %697 = vmatpush1.bf16.msra.mxu0 0
    %698 = vmatprep.subr.bf16.mxu0 0
    %699 = vmatpush1.bf16.msra.mxu0 0
    %700 = vmatprep.subr.bf16.mxu0 0
    %701 = vmatpush1.bf16.msra.mxu0 0
    %702 = vmatprep.subr.bf16.mxu0 0
    %703 = vmatpush1.bf16.msra.mxu0 0
    %704 = vmatprep.subr.bf16.mxu0 0
    %705 = vmatpush1.bf16.msra.mxu0 0
    %706 = vmatprep.subr.bf16.mxu0 0
    %707 = vmatpush1.bf16.msra.mxu0 0
    %708 = vmatprep.subr.bf16.mxu0 0
    %709 = vmatpush1.bf16.msra.mxu0 0
    %710 = vmatprep.subr.bf16.mxu0 0
    %711 = vmatpush1.bf16.msra.mxu0 0
    %712 = vmatprep.subr.bf16.mxu0 0
    %713 = vmatpush1.bf16.msra.mxu0 0
    %714 = vmatprep.subr.bf16.mxu0 0
    %715 = vmatpush1.bf16.msra.mxu0 0
    %716 = vmatprep.subr.bf16.mxu0 0
    %717 = vmatpush1.bf16.msra.mxu0 0
    %718 = vmatprep.subr.bf16.mxu0 0
    %719 = vmatpush1.bf16.msra.mxu0 0
    %720 = vmatprep.subr.bf16.mxu0 0
    %721 = vmatpush1.bf16.msra.mxu0 0
    %722 = vmatprep.subr.bf16.mxu0 0
    %723 = vmatpush1.bf16.msra.mxu0 0
    %724 = vmatprep.mubr.bf16.mxu0 0
    %725 = vmatmul.mubr.bf16.gmra.mrb[0].mxu0 %v687
    %v726 = vpop.f32.mrb[0].mxu0
    %v727 = vadd.f32 0.0, %v726
    %v728 = vpop.f32.mrb[0].mxu0
    %v729 = vpop.f32.mrb[0].mxu0
    %v730 = vpop.f32.mrb[0].mxu0
    %731 = vdwg.mxu0
    %732 = vst.msk [vmem:[#allocation2] sm:$0xff] %vm515, %v681
    %733 = vst.msk [vmem:[#allocation2 + $0x8] sm:$0xff] %vm515, %v727
    %735 = vrot.lane.b32.xlu0 %v509, 112
    %v736 = vpop.permute.xlu0 %735
    %738 = vrot.lane.b32.xlu0 %v511, 112
    %v739 = vpop.permute.xlu0 %738
    %v741 = vsel %vm515, %v736, 0
    %v744 = vsel %vm515, %v739, 0
    %746 = vmatprep.subr.bf16.mxu0 0
    %747 = vmatpush1.bf16.xpose.msra.mxu0 %v744
    %748 = vmatprep.subr.bf16.mxu0 0
    %749 = vmatpush1.bf16.xpose.msra.mxu0 0
    %750 = vmatprep.subr.bf16.mxu0 0
    %751 = vmatpush1.bf16.xpose.msra.mxu0 0
    %752 = vmatprep.subr.bf16.mxu0 0
    %753 = vmatpush1.bf16.xpose.msra.mxu0 0
    %754 = vmatprep.subr.bf16.mxu0 0
    %755 = vmatpush1.bf16.xpose.msra.mxu0 0
    %756 = vmatprep.subr.bf16.mxu0 0
    %757 = vmatpush1.bf16.xpose.msra.mxu0 0
    %758 = vmatprep.subr.bf16.mxu0 0
    %759 = vmatpush1.bf16.xpose.msra.mxu0 0
    %760 = vmatprep.subr.bf16.mxu0 0
    %761 = vmatpush1.bf16.xpose.msra.mxu0 0
    %762 = vmatprep.subr.bf16.mxu0 0
    %763 = vmatpush1.bf16.xpose.msra.mxu0 0
    %764 = vmatprep.subr.bf16.mxu0 0
    %765 = vmatpush1.bf16.xpose.msra.mxu0 0
    %766 = vmatprep.subr.bf16.mxu0 0
    %767 = vmatpush1.bf16.xpose.msra.mxu0 0
    %768 = vmatprep.subr.bf16.mxu0 0
    %769 = vmatpush1.bf16.xpose.msra.mxu0 0
    %770 = vmatprep.subr.bf16.mxu0 0
    %771 = vmatpush1.bf16.xpose.msra.mxu0 0
    %772 = vmatprep.subr.bf16.mxu0 0
    %773 = vmatpush1.bf16.xpose.msra.mxu0 0
    %774 = vmatprep.subr.bf16.mxu0 0
    %775 = vmatpush1.bf16.xpose.msra.mxu0 0
    %776 = vmatprep.subr.bf16.mxu0 0
    %777 = vmatpush1.bf16.xpose.msra.mxu0 0
    %778 = vmatprep.mubr.bf16.mxu0 0
    %779 = vmatmul.mubr.bf16.gmra.mrb[0].mxu0 %v741
    %v780 = vpop.f32.mrb[0].mxu0
    %v781 = vadd.f32 0.0, %v780
    %v782 = vpop.f32.mrb[0].mxu0
    %v783 = vpop.f32.mrb[0].mxu0
    %v784 = vpop.f32.mrb[0].mxu0
    %785 = vdwg.mxu0
    %787 = vrot.lane.b32.xlu0 %v510, 112
    %v788 = vpop.permute.xlu0 %787
    %790 = vrot.lane.b32.xlu0 %v512, 112
    %v791 = vpop.permute.xlu0 %790
    %v793 = vsel %vm515, %v788, 0
    %v796 = vsel %vm515, %v791, 0
    %798 = vmatprep.subr.bf16.mxu0 0
    %799 = vmatpush1.bf16.xpose.msra.mxu0 %v796
    %800 = vmatprep.subr.bf16.mxu0 0
    %801 = vmatpush1.bf16.xpose.msra.mxu0 0
    %802 = vmatprep.subr.bf16.mxu0 0
    %803 = vmatpush1.bf16.xpose.msra.mxu0 0
    %804 = vmatprep.subr.bf16.mxu0 0
    %805 = vmatpush1.bf16.xpose.msra.mxu0 0
    %806 = vmatprep.subr.bf16.mxu0 0
    %807 = vmatpush1.bf16.xpose.msra.mxu0 0
    %808 = vmatprep.subr.bf16.mxu0 0
    %809 = vmatpush1.bf16.xpose.msra.mxu0 0
    %810 = vmatprep.subr.bf16.mxu0 0
    %811 = vmatpush1.bf16.xpose.msra.mxu0 0
    %812 = vmatprep.subr.bf16.mxu0 0
    %813 = vmatpush1.bf16.xpose.msra.mxu0 0
    %814 = vmatprep.subr.bf16.mxu0 0
    %815 = vmatpush1.bf16.xpose.msra.mxu0 0
    %816 = vmatprep.subr.bf16.mxu0 0
    %817 = vmatpush1.bf16.xpose.msra.mxu0 0
    %818 = vmatprep.subr.bf16.mxu0 0
    %819 = vmatpush1.bf16.xpose.msra.mxu0 0
    %820 = vmatprep.subr.bf16.mxu0 0
    %821 = vmatpush1.bf16.xpose.msra.mxu0 0
    %822 = vmatprep.subr.bf16.mxu0 0
    %823 = vmatpush1.bf16.xpose.msra.mxu0 0
    %824 = vmatprep.subr.bf16.mxu0 0
    %825 = vmatpush1.bf16.xpose.msra.mxu0 0
    %826 = vmatprep.subr.bf16.mxu0 0
    %827 = vmatpush1.bf16.xpose.msra.mxu0 0
    %828 = vmatprep.subr.bf16.mxu0 0
    %829 = vmatpush1.bf16.xpose.msra.mxu0 0
    %830 = vmatprep.mubr.bf16.mxu0 0
    %831 = vmatmul.mubr.bf16.gmra.mrb[0].mxu0 %v793
    %v832 = vpop.f32.mrb[0].mxu0
    %v833 = vadd.f32 0.0, %v832
    %v834 = vpop.f32.mrb[0].mxu0
    %v835 = vpop.f32.mrb[0].mxu0
    %v836 = vpop.f32.mrb[0].mxu0
    %837 = vdwg.mxu0
    %v838 = vmul.f32 %v781, 0.25
    %v839 = vmul.f32 %v833, 0.25
    %v840 = vadd.f32 %v838, %v507
    %v841 = vadd.f32 %v839, %v508
    %v842 = vsel %vm612, %v840, -inf
    %843 = vmax.xlane.f32.xlu0 %v842
    %v844 = vpop.xlane.xlu0 %843
    %v845 = vsel %vm612, %v841, -inf
    %846 = vmax.xlane.f32.xlu0 %v845
    %v847 = vpop.xlane.xlu0 %846
    %v848 = vsub.f32 %v840, %v844
    %v849 = vsub.f32 %v841, %v847
    %v850 = vmul.f32 %v848, 1.442695
    %v851 = vpow.pop %v850
    %v852 = vmul.f32 %v849, 1.442695
    %v853 = vpow.pop %v852
    %v854 = vsel %vm612, %v851, 0.0
    %855 = vadd.xlane.f32.xlu0 %v854
    %v856 = vpop.xlane.xlu0 %855
    %v857 = vsel %vm612, %v853, 0.0
    %858 = vadd.xlane.f32.xlu0 %v857
    %v859 = vpop.xlane.xlu0 %858
    %v860 = vrcp.pop %v856
    %v861 = vrcp.pop %v859
    %v862 = vmul.f32 %v851, %v860
    %v863 = vmul.f32 %v853, %v861
    %s864 = scalar_lea.vmem [#allocation34], 16
    %865 = vst.msk [vmem:[%s864] sm:$0xff] %vm612, %v862
    %866 = vst.msk [vmem:[%s864 + $0x8] sm:$0xff] %vm612, %v863
    %v867 = vpack.c.bf16 %v862, %v862
    %v868 = vpack.c.bf16 %v863, %v863
    %870 = vrot.lane.b32.xlu0 %v513, 112
    %v871 = vpop.permute.xlu0 %870
    %v873 = vsel %vm612, %v867, 0
    %v876 = vsel %vm642, %v871, 0
    %878 = vmatprep.subr.bf16.mxu0 0
    %879 = vmatpush1.bf16.msra.mxu0 %v876
    %880 = vmatprep.subr.bf16.mxu0 0
    %881 = vmatpush1.bf16.msra.mxu0 0
    %882 = vmatprep.subr.bf16.mxu0 0
    %883 = vmatpush1.bf16.msra.mxu0 0
    %884 = vmatprep.subr.bf16.mxu0 0
    %885 = vmatpush1.bf16.msra.mxu0 0
    %886 = vmatprep.subr.bf16.mxu0 0
    %887 = vmatpush1.bf16.msra.mxu0 0
    %888 = vmatprep.subr.bf16.mxu0 0
    %889 = vmatpush1.bf16.msra.mxu0 0
    %890 = vmatprep.subr.bf16.mxu0 0
    %891 = vmatpush1.bf16.msra.mxu0 0
    %892 = vmatprep.subr.bf16.mxu0 0
    %893 = vmatpush1.bf16.msra.mxu0 0
    %894 = vmatprep.subr.bf16.mxu0 0
    %895 = vmatpush1.bf16.msra.mxu0 0
    %896 = vmatprep.subr.bf16.mxu0 0
    %897 = vmatpush1.bf16.msra.mxu0 0
    %898 = vmatprep.subr.bf16.mxu0 0
    %899 = vmatpush1.bf16.msra.mxu0 0
    %900 = vmatprep.subr.bf16.mxu0 0
    %901 = vmatpush1.bf16.msra.mxu0 0
    %902 = vmatprep.subr.bf16.mxu0 0
    %903 = vmatpush1.bf16.msra.mxu0 0
    %904 = vmatprep.subr.bf16.mxu0 0
    %905 = vmatpush1.bf16.msra.mxu0 0
    %906 = vmatprep.subr.bf16.mxu0 0
    %907 = vmatpush1.bf16.msra.mxu0 0
    %908 = vmatprep.subr.bf16.mxu0 0
    %909 = vmatpush1.bf16.msra.mxu0 0
    %910 = vmatprep.mubr.bf16.mxu0 0
    %911 = vmatmul.mubr.bf16.gmra.mrb[0].mxu0 %v873
    %v912 = vpop.f32.mrb[0].mxu0
    %v913 = vadd.f32 0.0, %v912
    %v914 = vpop.f32.mrb[0].mxu0
    %v915 = vpop.f32.mrb[0].mxu0
    %v916 = vpop.f32.mrb[0].mxu0
    %917 = vdwg.mxu0
    %919 = vrot.lane.b32.xlu0 %v514, 112
    %v920 = vpop.permute.xlu0 %919
    %v922 = vsel %vm612, %v868, 0
    %v925 = vsel %vm642, %v920, 0
    %927 = vmatprep.subr.bf16.mxu0 0
    %928 = vmatpush1.bf16.msra.mxu0 %v925
    %929 = vmatprep.subr.bf16.mxu0 0
    %930 = vmatpush1.bf16.msra.mxu0 0
    %931 = vmatprep.subr.bf16.mxu0 0
    %932 = vmatpush1.bf16.msra.mxu0 0
    %933 = vmatprep.subr.bf16.mxu0 0
    %934 = vmatpush1.bf16.msra.mxu0 0
    %935 = vmatprep.subr.bf16.mxu0 0
    %936 = vmatpush1.bf16.msra.mxu0 0
    %937 = vmatprep.subr.bf16.mxu0 0
    %938 = vmatpush1.bf16.msra.mxu0 0
    %939 = vmatprep.subr.bf16.mxu0 0
    %940 = vmatpush1.bf16.msra.mxu0 0
    %941 = vmatprep.subr.bf16.mxu0 0
    %942 = vmatpush1.bf16.msra.mxu0 0
    %943 = vmatprep.subr.bf16.mxu0 0
    %944 = vmatpush1.bf16.msra.mxu0 0
    %945 = vmatprep.subr.bf16.mxu0 0
    %946 = vmatpush1.bf16.msra.mxu0 0
    %947 = vmatprep.subr.bf16.mxu0 0
    %948 = vmatpush1.bf16.msra.mxu0 0
    %949 = vmatprep.subr.bf16.mxu0 0
    %950 = vmatpush1.bf16.msra.mxu0 0
    %951 = vmatprep.subr.bf16.mxu0 0
    %952 = vmatpush1.bf16.msra.mxu0 0
    %953 = vmatprep.subr.bf16.mxu0 0
    %954 = vmatpush1.bf16.msra.mxu0 0
    %955 = vmatprep.subr.bf16.mxu0 0
    %956 = vmatpush1.bf16.msra.mxu0 0
    %957 = vmatprep.subr.bf16.mxu0 0
    %958 = vmatpush1.bf16.msra.mxu0 0
    %959 = vmatprep.mubr.bf16.mxu0 0
    %960 = vmatmul.mubr.bf16.gmra.mrb[0].mxu0 %v922
    %v961 = vpop.f32.mrb[0].mxu0
    %v962 = vadd.f32 0.0, %v961
    %v963 = vpop.f32.mrb[0].mxu0
    %v964 = vpop.f32.mrb[0].mxu0
    %v965 = vpop.f32.mrb[0].mxu0
    %966 = vdwg.mxu0
    %969 = vrot.lane.b32.xlu0 %v913, 16
    %v970 = vpop.permute.xlu0 %969
    %971 = vrot.lane.b32.xlu0 %v962, 16
    %v972 = vpop.permute.xlu0 %971
    %vm975 = vcmask 261248
    %976 = vst.msk [vmem:[#allocation2] sm:$0xff] %vm975, %v970
    %977 = vst.msk [vmem:[#allocation2 + $0x8] sm:$0xff] %vm975, %v972
    %v978 = vld [vmem:[#allocation2] sm:$0xff]
    %v979 = vld [vmem:[#allocation2 + $0x8] sm:$0xff]
    %v980 = vpack.c.bf16 %v979, %v978
    %v981 = vld [vmem:[#allocation18] sm:$0xf]
    %v982 = vld [vmem:[#allocation18 + $0x4] sm:$0xf]
    %v983 = vld [vmem:[#allocation18 + $0x8] sm:$0xf]
    %v984 = vld [vmem:[#allocation18 + $0xc] sm:$0xf]
    %v985 = vld [vmem:[#allocation20] sm:$0x1]
    %v987 = vlaneseq
    %v988 = vshrl.u32 %v987, 7
    %v989 = vsub.s32 0, %v988
    %v990 = vrot.slane %v985, %v989
    %v996 = vunpack.c.l.b16 %v981
    %v997 = vunpack.c.l.b16 %v982
    %v998 = vunpack.c.l.b16 %v983
    %v999 = vunpack.c.l.b16 %v984
    %v1000 = vpack.c.b16 %v997, %v996
    %v1001 = vpack.c.b16 %v999, %v998
    %v1005 = vsel %vm332, %v980, 0
    %1007 = vmatprep.subr.bf16.mxu0 0
    %1008 = vmatpush1.bf16.msra.mxu0 %v1000
    %1009 = vmatprep.subr.bf16.mxu0 0
    %1010 = vmatpush1.bf16.msra.mxu0 %v1001
    %1011 = vmatprep.subr.bf16.mxu0 0
    %1012 = vmatpush1.bf16.msra.mxu0 0
    %1013 = vmatprep.subr.bf16.mxu0 0
    %1014 = vmatpush1.bf16.msra.mxu0 0
    %1015 = vmatprep.subr.bf16.mxu0 0
    %1016 = vmatpush1.bf16.msra.mxu0 0
    %1017 = vmatprep.subr.bf16.mxu0 0
    %1018 = vmatpush1.bf16.msra.mxu0 0
    %1019 = vmatprep.subr.bf16.mxu0 0
    %1020 = vmatpush1.bf16.msra.mxu0 0
    %1021 = vmatprep.subr.bf16.mxu0 0
    %1022 = vmatpush1.bf16.msra.mxu0 0
    %1023 = vmatprep.subr.bf16.mxu0 0
    %1024 = vmatpush1.bf16.msra.mxu0 0
    %1025 = vmatprep.subr.bf16.mxu0 0
    %1026 = vmatpush1.bf16.msra.mxu0 0
    %1027 = vmatprep.subr.bf16.mxu0 0
    %1028 = vmatpush1.bf16.msra.mxu0 0
    %1029 = vmatprep.subr.bf16.mxu0 0
    %1030 = vmatpush1.bf16.msra.mxu0 0
    %1031 = vmatprep.subr.bf16.mxu0 0
    %1032 = vmatpush1.bf16.msra.mxu0 0
    %1033 = vmatprep.subr.bf16.mxu0 0
    %1034 = vmatpush1.bf16.msra.mxu0 0
    %1035 = vmatprep.subr.bf16.mxu0 0
    %1036 = vmatpush1.bf16.msra.mxu0 0
    %1037 = vmatprep.subr.bf16.mxu0 0
    %1038 = vmatpush1.bf16.msra.mxu0 0
    %1039 = vmatprep.mubr.bf16.mxu0 0
    %1040 = vmatmul.mubr.bf16.gmra.mrb[0].mxu0 %v1005
    %v1041 = vpop.f32.mrb[0].mxu0
    %v1042 = vadd.f32 %v990, %v1041
    %v1043 = vpop.f32.mrb[0].mxu0
    %v1044 = vpop.f32.mrb[0].mxu0
    %v1045 = vadd.f32 %v990, %v1044
    %v1046 = vpop.f32.mrb[0].mxu0
    %1047 = vdwg.mxu0
    %v1048 = vadd.f32 %v1042, %v304
    %v1049 = vadd.f32 %v1045, %v305
    %v1050 = vld [vmem:[#allocation21] sm:$0x1]
    %v1051 = vld [vmem:[#allocation23] sm:$0x1]
    %v1052 = vsel %vm332, %v1048, 0.0
    %1053 = vadd.xlane.f32.xlu0 %v1052
    %v1054 = vpop.xlane.xlu0 %1053
    %v1055 = vsel %vm332, %v1049, 0.0
    %1056 = vadd.xlane.f32.xlu0 %v1055
    %v1057 = vpop.xlane.xlu0 %1056
    %v1058 = vrcp.pop 32.0
    %v1059 = vmul.f32 %v1054, %v1058
    %v1060 = vmul.f32 %v1057, %v1058
    %v1061 = vsub.f32 %v1048, %v1059
    %v1062 = vsub.f32 %v1049, %v1060
    %v1063 = vmul.f32 %v1061, %v1061
    %v1064 = vmul.f32 %v1062, %v1062
    %v1065 = vsel %vm332, %v1063, 0.0
    %1066 = vadd.xlane.f32.xlu0 %v1065
    %v1067 = vpop.xlane.xlu0 %1066
    %v1068 = vsel %vm332, %v1064, 0.0
    %1069 = vadd.xlane.f32.xlu0 %v1068
    %v1070 = vpop.xlane.xlu0 %1069
    %v1071 = vmul.f32 %v1067, %v1058
    %v1072 = vmul.f32 %v1070, %v1058
    %v1073 = vadd.f32 %v1071, 1e-05
    %v1074 = vadd.f32 %v1072, 1e-05
    %v1075 = vrsqrt.pop %v1073
    %v1076 = vrsqrt.pop %v1074
    %v1077 = vmul.f32 %v1061, %v1075
    %v1078 = vmul.f32 %v1062, %v1076
    %v1080 = vlaneseq
    %v1081 = vshrl.u32 %v1080, 7
    %v1082 = vsub.s32 0, %v1081
    %v1083 = vrot.slane %v1050, %v1082
    %v1085 = vmul.f32 %v1077, %v1083
    %v1086 = vmul.f32 %v1078, %v1083
    %v1088 = vlaneseq
    %v1089 = vshrl.u32 %v1088, 7
    %v1090 = vsub.s32 0, %v1089
    %v1091 = vrot.slane %v1051, %v1090
    %v1093 = vadd.f32 %v1085, %v1091
    %v1094 = vadd.f32 %v1086, %v1091
    %1096 = vset.pattern.permute.xlu0 0
    %1097 = vperm.xlu0 %1096, %v306
    %v1098 = vpop.permute.xlu0 %1097
    %1101 = vset.pattern.permute.xlu0 0
    %1102 = vperm.xlu0 %1101, %v307
    %v1103 = vpop.permute.xlu0 %1102
    %v1105 = vmul.f32 %v1093, %v1098
    %v1106 = vmul.f32 %v1094, %v1103
    %v1107 = vpack.c.bf16 %v1106, %v1105
    %v1108 = vld [vmem:[#allocation24] sm:$0xf]
    %v1109 = vld [vmem:[#allocation24 + $0x4] sm:$0xf]
    %v1110 = vld [vmem:[#allocation24 + $0x8] sm:$0xf]
    %v1111 = vld [vmem:[#allocation24 + $0xc] sm:$0xf]
    %v1112 = vld [vmem:[#allocation26] sm:$0x1]
    %v1114 = vlaneseq
    %v1115 = vshrl.u32 %v1114, 7
    %v1116 = vsub.s32 0, %v1115
    %v1117 = vrot.slane %v1112, %v1116
    %v1123 = vunpack.c.l.b16 %v1108
    %v1124 = vunpack.c.l.b16 %v1109
    %v1125 = vunpack.c.l.b16 %v1110
    %v1126 = vunpack.c.l.b16 %v1111
    %v1127 = vpack.c.b16 %v1124, %v1123
    %v1128 = vpack.c.b16 %v1126, %v1125
    %v1132 = vsel %vm332, %v1107, 0
    %1134 = vmatprep.subr.bf16.mxu0 0
    %1135 = vmatpush1.bf16.msra.mxu0 %v1127
    %1136 = vmatprep.subr.bf16.mxu0 0
    %1137 = vmatpush1.bf16.msra.mxu0 %v1128
    %1138 = vmatprep.subr.bf16.mxu0 0
    %1139 = vmatpush1.bf16.msra.mxu0 0
    %1140 = vmatprep.subr.bf16.mxu0 0
    %1141 = vmatpush1.bf16.msra.mxu0 0
    %1142 = vmatprep.subr.bf16.mxu0 0
    %1143 = vmatpush1.bf16.msra.mxu0 0
    %1144 = vmatprep.subr.bf16.mxu0 0
    %1145 = vmatpush1.bf16.msra.mxu0 0
    %1146 = vmatprep.subr.bf16.mxu0 0
    %1147 = vmatpush1.bf16.msra.mxu0 0
    %1148 = vmatprep.subr.bf16.mxu0 0
    %1149 = vmatpush1.bf16.msra.mxu0 0
    %1150 = vmatprep.subr.bf16.mxu0 0
    %1151 = vmatpush1.bf16.msra.mxu0 0
    %1152 = vmatprep.subr.bf16.mxu0 0
    %1153 = vmatpush1.bf16.msra.mxu0 0
    %1154 = vmatprep.subr.bf16.mxu0 0
    %1155 = vmatpush1.bf16.msra.mxu0 0
    %1156 = vmatprep.subr.bf16.mxu0 0
    %1157 = vmatpush1.bf16.msra.mxu0 0
    %1158 = vmatprep.subr.bf16.mxu0 0
    %1159 = vmatpush1.bf16.msra.mxu0 0
    %1160 = vmatprep.subr.bf16.mxu0 0
    %1161 = vmatpush1.bf16.msra.mxu0 0
    %1162 = vmatprep.subr.bf16.mxu0 0
    %1163 = vmatpush1.bf16.msra.mxu0 0
    %1164 = vmatprep.subr.bf16.mxu0 0
    %1165 = vmatpush1.bf16.msra.mxu0 0
    %1166 = vmatprep.mubr.bf16.mxu0 0
    %1167 = vmatmul.mubr.bf16.gmra.mrb[0].mxu0 %v1132
    %v1168 = vpop.f32.mrb[0].mxu0
    %v1169 = vadd.f32 %v1117, %v1168
    %v1170 = vpop.f32.mrb[0].mxu0
    %v1171 = vpop.f32.mrb[0].mxu0
    %v1172 = vadd.f32 %v1117, %v1171
    %v1173 = vpop.f32.mrb[0].mxu0
    %1174 = vdwg.mxu0
    %v1175 = vmax.f32 %v1169, 0.0
    %v1176 = vmax.f32 %v1172, 0.0
    %v1177 = vpack.c.bf16 %v1176, %v1175
    %v1178 = vld [vmem:[#allocation27] sm:$0xf]
    %v1179 = vld [vmem:[#allocation27 + $0x4] sm:$0xf]
    %v1180 = vld [vmem:[#allocation27 + $0x8] sm:$0xf]
    %v1181 = vld [vmem:[#allocation27 + $0xc] sm:$0xf]
    %v1182 = vld [vmem:[#allocation27 + $0x10] sm:$0xf]
    %v1183 = vld [vmem:[#allocation27 + $0x14] sm:$0xf]
    %v1184 = vld [vmem:[#allocation27 + $0x18] sm:$0xf]
    %v1185 = vld [vmem:[#allocation27 + $0x1c] sm:$0xf]
    %v1186 = vld [vmem:[#allocation29] sm:$0x1]
    %v1188 = vlaneseq
    %v1189 = vshrl.u32 %v1188, 7
    %v1190 = vsub.s32 0, %v1189
    %v1191 = vrot.slane %v1186, %v1190
    %v1201 = vunpack.c.l.b16 %v1178
    %v1202 = vunpack.c.l.b16 %v1179
    %v1203 = vunpack.c.l.b16 %v1180
    %v1204 = vunpack.c.l.b16 %v1181
    %v1205 = vunpack.c.l.b16 %v1182
    %v1206 = vunpack.c.l.b16 %v1183
    %v1207 = vunpack.c.l.b16 %v1184
    %v1208 = vunpack.c.l.b16 %v1185
    %v1209 = vpack.c.b16 %v1202, %v1201
    %v1210 = vpack.c.b16 %v1204, %v1203
    %v1211 = vpack.c.b16 %v1206, %v1205
    %v1212 = vpack.c.b16 %v1208, %v1207
    %vm1217 = vcmask 523264
    %v1219 = vsel %vm1217, %v1177, 0
    %1221 = vmatprep.subr.bf16.mxu0 0
    %1222 = vmatpush1.bf16.msra.mxu0 %v1209
    %1223 = vmatprep.subr.bf16.mxu0 0
    %1224 = vmatpush1.bf16.msra.mxu0 %v1210
    %1225 = vmatprep.subr.bf16.mxu0 0
    %1226 = vmatpush1.bf16.msra.mxu0 %v1211
    %1227 = vmatprep.subr.bf16.mxu0 0
    %1228 = vmatpush1.bf16.msra.mxu0 %v1212
    %1229 = vmatprep.subr.bf16.mxu0 0
    %1230 = vmatpush1.bf16.msra.mxu0 0
    %1231 = vmatprep.subr.bf16.mxu0 0
    %1232 = vmatpush1.bf16.msra.mxu0 0
    %1233 = vmatprep.subr.bf16.mxu0 0
    %1234 = vmatpush1.bf16.msra.mxu0 0
    %1235 = vmatprep.subr.bf16.mxu0 0
    %1236 = vmatpush1.bf16.msra.mxu0 0
    %1237 = vmatprep.subr.bf16.mxu0 0
    %1238 = vmatpush1.bf16.msra.mxu0 0
    %1239 = vmatprep.subr.bf16.mxu0 0
    %1240 = vmatpush1.bf16.msra.mxu0 0
    %1241 = vmatprep.subr.bf16.mxu0 0
    %1242 = vmatpush1.bf16.msra.mxu0 0
    %1243 = vmatprep.subr.bf16.mxu0 0
    %1244 = vmatpush1.bf16.msra.mxu0 0
    %1245 = vmatprep.subr.bf16.mxu0 0
    %1246 = vmatpush1.bf16.msra.mxu0 0
    %1247 = vmatprep.subr.bf16.mxu0 0
    %1248 = vmatpush1.bf16.msra.mxu0 0
    %1249 = vmatprep.subr.bf16.mxu0 0
    %1250 = vmatpush1.bf16.msra.mxu0 0
    %1251 = vmatprep.subr.bf16.mxu0 0
    %1252 = vmatpush1.bf16.msra.mxu0 0
    %1253 = vmatprep.mubr.bf16.mxu0 0
    %1254 = vmatmul.mubr.bf16.gmra.mrb[0].mxu0 %v1219
    %v1255 = vpop.f32.mrb[0].mxu0
    %v1256 = vadd.f32 %v1191, %v1255
    %v1257 = vpop.f32.mrb[0].mxu0
    %v1258 = vpop.f32.mrb[0].mxu0
    %v1259 = vadd.f32 %v1191, %v1258
    %v1260 = vpop.f32.mrb[0].mxu0
    %1261 = vdwg.mxu0
    %v1262 = vadd.f32 %v1256, %v1105
    %v1263 = vadd.f32 %v1259, %v1106
    %v1264 = vld [vmem:[#allocation30] sm:$0x1]
    %v1265 = vld [vmem:[#allocation32] sm:$0x1]
    %v1266 = vsel %vm332, %v1262, 0.0
    %1267 = vadd.xlane.f32.xlu0 %v1266
    %v1268 = vpop.xlane.xlu0 %1267
    %v1269 = vsel %vm332, %v1263, 0.0
    %1270 = vadd.xlane.f32.xlu0 %v1269
    %v1271 = vpop.xlane.xlu0 %1270
    %v1272 = vmul.f32 %v1268, %v1058
    %v1273 = vmul.f32 %v1271, %v1058
    %v1274 = vsub.f32 %v1262, %v1272
    %v1275 = vsub.f32 %v1263, %v1273
    %v1276 = vmul.f32 %v1274, %v1274
    %v1277 = vmul.f32 %v1275, %v1275
    %v1278 = vsel %vm332, %v1276, 0.0
    %1279 = vadd.xlane.f32.xlu0 %v1278
    %v1280 = vpop.xlane.xlu0 %1279
    %v1281 = vsel %vm332, %v1277, 0.0
    %1282 = vadd.xlane.f32.xlu0 %v1281
    %v1283 = vpop.xlane.xlu0 %1282
    %v1284 = vmul.f32 %v1280, %v1058
    %v1285 = vmul.f32 %v1283, %v1058
    %v1286 = vadd.f32 %v1284, 1e-05
    %v1287 = vadd.f32 %v1285, 1e-05
    %v1288 = vrsqrt.pop %v1286
    %v1289 = vrsqrt.pop %v1287
    %v1290 = vmul.f32 %v1274, %v1288
    %v1291 = vmul.f32 %v1275, %v1289
    %v1293 = vlaneseq
    %v1294 = vshrl.u32 %v1293, 7
    %v1295 = vsub.s32 0, %v1294
    %v1296 = vrot.slane %v1264, %v1295
    %v1298 = vmul.f32 %v1290, %v1296
    %v1299 = vmul.f32 %v1291, %v1296
    %v1301 = vlaneseq
    %v1302 = vshrl.u32 %v1301, 7
    %v1303 = vsub.s32 0, %v1302
    %v1304 = vrot.slane %v1265, %v1303
    %v1306 = vadd.f32 %v1298, %v1304
    %v1307 = vadd.f32 %v1299, %v1304
    %v1308 = vmul.f32 %v1306, %v1098
    %v1309 = vmul.f32 %v1307, %v1103
    %1310 = vst.msk [vmem:[#allocation33] sm:$0xff] %vm332, %v1308
    %1311 = vst.msk [vmem:[#allocation33 + $0x8] sm:$0xff] %vm332, %v1309
    // Predicated region
    $region154: #{tpu_custom_call.1} parent=1 // pred_check
      _
    $region155: #{tpu_custom_call.1} parent=1 // pred_check_branch
      %1313 = sbr.rel (0) target = $region157
    $region156: #{tpu_custom_call.1} parent=1 // pred_region
      %s1315 = ssub.s32 256, 256
      %1316 = vsyncadd [#allocation5], %s1315
      %s1317 = sshll.u32 [#allocation33], 4
      %s1318 = int_to_ptr.vmem [resolvable:$true] %s1317
      %1323 = dma.vmem_to_hbm [thread:$0]  %s1318, 256, %s19, [#allocation5], 128, 128, 8
    $region157: #{tpu_custom_call.1} parent=1 // pred_fallthru
      _
    // Predicated region
    $region158: #{tpu_custom_call.1} parent=1 // pred_check
      _
    $region159: #{tpu_custom_call.1} parent=1 // pred_check_branch
      %1325 = sbr.rel (0) target = $region161
    $region160: #{tpu_custom_call.1} parent=1 // pred_region
      %s1327 = ssub.s32 512, 512
      %1328 = vsyncadd [#allocation35], %s1327
      %s1329 = sshll.u32 [#allocation34], 4
      %s1330 = int_to_ptr.vmem [resolvable:$true] %s1329
      %1335 = dma.vmem_to_hbm [thread:$0]  %s1330, 512, %s20, [#allocation35], 128, 128, 8
    $region161: #{tpu_custom_call.1} parent=1 // pred_fallthru
      _
    // Predicated region
    $region162: #{tpu_custom_call.1} parent=1 // pred_check
      _
    $region163: #{tpu_custom_call.1} parent=1 // pred_check_branch
      %1337 = sbr.rel (0) target = $region165
    $region164: #{tpu_custom_call.1} parent=1 // pred_region
      %1338 = dma.done [#allocation5], 256
    $region165: #{tpu_custom_call.1} parent=1 // pred_fallthru
      _
    // Predicated region
    $region166: #{tpu_custom_call.1} parent=1 // pred_check
      _
    $region167: #{tpu_custom_call.1} parent=1 // pred_check_branch
      %1340 = sbr.rel (0) target = $region169
    $region168: #{tpu_custom_call.1} parent=1 // pred_region
      %1341 = dma.done [#allocation35], 512
    $region169: #{tpu_custom_call.1} parent=1 // pred_fallthru
      _
    %1342 = vsyncpa [#allocation4], 1
    %1343 = vsyncpa [#allocation7], 1
    %1344 = vsyncpa [#allocation10], 1
    %1345 = vsyncpa [#allocation13], 1
    %1346 = vsyncpa [#allocation16], 1
    %1347 = vsyncpa [#allocation19], 1
    %1348 = vsyncpa [#allocation22], 1
    %1349 = vsyncpa [#allocation25], 1
    %1350 = vsyncpa [#allocation28], 1
    %1351 = vsyncpa [#allocation31], 1
    %1352 = vsyncpa [#allocation5], 1
    %1353 = vsyncpa [#allocation35], 1

</llo_original>
